<compile_context>
chip_gen: v7x
topology: tpu7x:2x2x1
jax: 0.10.0
libtpu: 0.0.40
codegen_flags: <defaults>
</compile_context>

<pallas_src>
import functools

import jax
import jax.numpy as jnp
from jax.experimental import pallas as pl
from jax.experimental.pallas import tpu as pltpu


# ------------------------------ fused kernel ------------------------------- #
def _fused_kernel(x_ref, r_ref, w1_ref, w2_ref, gamma_ref, beta_ref, o_ref, *,
                  inv_p, eps):
    """conv1 -> batch-stat BN -> +residual -> ReLU -> conv2, all VMEM-resident."""
    # First 1x1 conv as an MXU matmul in (C, P) layout: (c,c) @ (c,p) -> (c,p).
    h = jnp.dot(w1_ref[...], x_ref[...], preferred_element_type=jnp.float32)

    # Per-channel batch statistics (channels on sublane axis, reduce over lanes).
    s = jnp.sum(h, axis=1, keepdims=True)           # (c_pad, 1)
    ss = jnp.sum(h * h, axis=1, keepdims=True)      # (c_pad, 1)
    mean = s * inv_p
    var = ss * inv_p - mean * mean                  # biased variance (training BN)
    scale = gamma_ref[...] * jax.lax.rsqrt(var + eps)   # (c_pad, 1)
    shift = beta_ref[...] - mean * scale                 # (c_pad, 1)

    # BN apply + residual add + ReLU in f32, then second 1x1 conv on the MXU.
    y = jnp.maximum(r_ref[...].astype(jnp.float32) + h * scale + shift, 0.0)
    o_ref[...] = jnp.dot(w2_ref[...], y.astype(jnp.bfloat16),
                         preferred_element_type=jnp.float32).astype(o_ref.dtype)


# -------------------------------- wrapper ----------------------------------- #
def fused_conv_bn_add_relu_conv(x117, x105, w1, w2, gamma, beta):
    """x117, x105: NCHW float32.  w1, w2: (Cout, Cin, 1, 1).  Returns NCHW float32."""
    N, C, H, W = x117.shape
    P = N * H * W
    c_pad = ((C + 127) // 128) * 128
    p_pad = ((P + 127) // 128) * 128

    def to_cp(a, dtype):
        # NCHW -> (C, N*H*W).  For the production N=1 case this is a free reshape.
        a = jnp.transpose(a, (1, 0, 2, 3)).reshape(C, P).astype(dtype)
        return jnp.pad(a, ((0, c_pad - C), (0, p_pad - P)))

    x_cp = to_cp(x117, jnp.bfloat16)   # matmul operand -> bf16
    r_cp = to_cp(x105, jnp.bfloat16)   # residual streamed bf16, added in f32 in-kernel

    def prep_w(w):
        # (Cout, Cin, 1, 1) -> (Cout, Cin); no transpose needed in (C, P) layout.
        return jnp.pad(w.reshape(C, C).astype(jnp.bfloat16),
                       ((0, c_pad - C), (0, c_pad - C)))

    w1_p = prep_w(w1)
    w2_p = prep_w(w2)

    gamma_p = jnp.pad(gamma.astype(jnp.float32), (0, c_pad - C)).reshape(c_pad, 1)
    beta_p = jnp.pad(beta.astype(jnp.float32), (0, c_pad - C)).reshape(c_pad, 1)

    kernel = functools.partial(_fused_kernel, inv_p=1.0 / float(P), eps=1e-5)

    out_cp = pl.pallas_call(
        kernel,
        grid=(1,),
        in_specs=[
            pl.BlockSpec((c_pad, p_pad), lambda i: (0, 0)),   # x  (C, P) bf16
            pl.BlockSpec((c_pad, p_pad), lambda i: (0, 0)),   # residual (C, P) bf16
            pl.BlockSpec((c_pad, c_pad), lambda i: (0, 0)),   # w1 (Cout, Cin) bf16
            pl.BlockSpec((c_pad, c_pad), lambda i: (0, 0)),   # w2 (Cout, Cin) bf16
            pl.BlockSpec((c_pad, 1), lambda i: (0, 0)),       # gamma
            pl.BlockSpec((c_pad, 1), lambda i: (0, 0)),       # beta
        ],
        out_specs=pl.BlockSpec((c_pad, p_pad), lambda i: (0, 0)),
        out_shape=jax.ShapeDtypeStruct((c_pad, p_pad), jnp.float32),
        compiler_params=pltpu.CompilerParams(
            dimension_semantics=("arbitrary",),
            vmem_limit_bytes=48 * 1024 * 1024,   # fits v7x (64 MiB physical) too
        ),
    )(x_cp, r_cp, w1_p, w2_p, gamma_p, beta_p)

    # crop padding, (C, P) -> NCHW (free transpose when N == 1).
    out = out_cp[:C, :P].reshape(C, N, H, W)
    return jnp.transpose(out, (1, 0, 2, 3))


# ----------------------------- pure-JAX reference --------------------------- #
def _reference(x117, x105, w1, w2, gamma, beta):
    """f32 reference of the PyTorch forward (training-mode BN, biased variance)."""
    N, C, H, W = x117.shape
    x = jnp.transpose(x117, (0, 2, 3, 1)).reshape(-1, C)
    r = jnp.transpose(x105, (0, 2, 3, 1)).reshape(-1, C)
    h = x @ w1.reshape(C, C).T
    mean = jnp.mean(h, axis=0, keepdims=True)
    var = jnp.mean((h - mean) ** 2, axis=0, keepdims=True)
    h = (h - mean) / jnp.sqrt(var + 1e-5) * gamma.reshape(1, C) + beta.reshape(1, C)
    y = jnp.maximum(r + h, 0.0)
    o = y @ w2.reshape(C, C).T
    return jnp.transpose(o.reshape(N, H, W, C), (0, 3, 1, 2))


if __name__ == "__main__":
    # Scaled-down version of the module (original: N=1, C=1232, 14x14).
    # C=200 exercises the channel padding path (-> 256); P = 1*14*14 = 196
    # pads to 256 lanes, matching the production single-VMEM-resident regime.
    N, C, H, W = 1, 200, 14, 14

    key = jax.random.PRNGKey(0)
    k1, k2, k3, k4, k5, k6 = jax.random.split(key, 6)

    x117 = jax.random.normal(k1, (N, C, H, W), dtype=jnp.float32)
    x105 = jax.random.normal(k2, (N, C, H, W), dtype=jnp.float32)
    w1 = jax.random.normal(k3, (C, C, 1, 1), dtype=jnp.float32) * 0.05
    w2 = jax.random.normal(k4, (C, C, 1, 1), dtype=jnp.float32) * 0.05
    gamma = 1.0 + 0.1 * jax.random.normal(k5, (C,), dtype=jnp.float32)
    beta = 0.1 * jax.random.normal(k6, (C,), dtype=jnp.float32)

    fused = jax.jit(fused_conv_bn_add_relu_conv)
    out = jax.block_until_ready(fused(x117, x105, w1, w2, gamma, beta))

    ref = _reference(x117, x105, w1, w2, gamma, beta)
    assert out.shape == (N, C, H, W)
    # bf16 matmul operands / bf16 residual stream -> ~1e-3 relative error vs f32.
    rel_err = float(jnp.max(jnp.abs(out - ref)) / (jnp.max(jnp.abs(ref)) + 1e-6))
    assert rel_err < 5e-2, f"mismatch vs reference: rel_err={rel_err}"

    print("KERNEL_OK")
</pallas_src>

<mosaic_0001>
module attributes {stable_mosaic.version = 11 : i64} {
  func.func @_fused_kernel(%arg0: i32, %arg1: memref<256x256xbf16, #tpu.memory_space<vmem>>, %arg2: memref<256x256xbf16, #tpu.memory_space<vmem>>, %arg3: memref<256x256xbf16, #tpu.memory_space<vmem>>, %arg4: memref<256x256xbf16, #tpu.memory_space<vmem>>, %arg5: memref<256x1xf32, #tpu.memory_space<vmem>>, %arg6: memref<256x1xf32, #tpu.memory_space<vmem>>, %arg7: memref<256x256xf32, #tpu.memory_space<vmem>>) attributes {dimension_semantics = [#tpu.dimension_semantics<arbitrary>], iteration_bounds = array<i64: 1>, scalar_prefetch = 0 : i64, scratch_operands = 0 : i64, tpu.core_type = #tpu.core_type<tc>, window_params = [{pipeline_mode = #tpu.pipeline_mode<synchronous>, transform_indices = @transform_0, window_bounds = array<i64: 256, 256>}, {pipeline_mode = #tpu.pipeline_mode<synchronous>, transform_indices = @transform_1, window_bounds = array<i64: 256, 256>}, {pipeline_mode = #tpu.pipeline_mode<synchronous>, transform_indices = @transform_2, window_bounds = array<i64: 256, 256>}, {pipeline_mode = #tpu.pipeline_mode<synchronous>, transform_indices = @transform_3, window_bounds = array<i64: 256, 256>}, {pipeline_mode = #tpu.pipeline_mode<synchronous>, transform_indices = @transform_4, window_bounds = array<i64: 256, 1>}, {pipeline_mode = #tpu.pipeline_mode<synchronous>, transform_indices = @transform_5, window_bounds = array<i64: 256, 1>}, {pipeline_mode = #tpu.pipeline_mode<synchronous>, transform_indices = @transform_6, window_bounds = array<i64: 256, 256>}]} {
    %c0 = arith.constant 0 : index
    %c0_0 = arith.constant 0 : index
    %0 = vector.load %arg3[%c0, %c0_0] : memref<256x256xbf16, #tpu.memory_space<vmem>>, vector<256x256xbf16>
    %c0_1 = arith.constant 0 : index
    %c0_2 = arith.constant 0 : index
    %1 = vector.load %arg1[%c0_1, %c0_2] : memref<256x256xbf16, #tpu.memory_space<vmem>>, vector<256x256xbf16>
    %cst = arith.constant dense<0.000000e+00> : vector<256x256xf32>
    %2 = tpu.matmul %0, %1, %cst {dimension_numbers = #tpu.dot_dimension_numbers<[1], [0], [0], [1], [0, 0, 1, 1], [], []>} : vector<256x256xbf16>, vector<256x256xbf16>, vector<256x256xf32> -> vector<256x256xf32>
    %cst_3 = arith.constant dense<0.000000e+00> : vector<256xf32>
    %3 = vector.multi_reduction <add>, %2, %cst_3 [1] : vector<256x256xf32> to vector<256xf32>
    %4 = vector.shape_cast %3 : vector<256xf32> to vector<256x1xf32>
    %5 = arith.mulf %2, %2 : vector<256x256xf32>
    %cst_4 = arith.constant dense<0.000000e+00> : vector<256xf32>
    %6 = vector.multi_reduction <add>, %5, %cst_4 [1] : vector<256x256xf32> to vector<256xf32>
    %7 = vector.shape_cast %6 : vector<256xf32> to vector<256x1xf32>
    %cst_5 = arith.constant 0.00510204071 : f32
    %8 = vector.broadcast %cst_5 : f32 to vector<256x1xf32>
    %9 = arith.mulf %4, %8 : vector<256x1xf32>
    %cst_6 = arith.constant 0.00510204071 : f32
    %10 = vector.broadcast %cst_6 : f32 to vector<256x1xf32>
    %11 = arith.mulf %7, %10 : vector<256x1xf32>
    %12 = arith.mulf %9, %9 : vector<256x1xf32>
    %13 = arith.subf %11, %12 : vector<256x1xf32>
    %c0_7 = arith.constant 0 : index
    %c0_8 = arith.constant 0 : index
    %14 = vector.load %arg5[%c0_7, %c0_8] : memref<256x1xf32, #tpu.memory_space<vmem>>, vector<256x1xf32>
    %cst_9 = arith.constant 9.99999974E-6 : f32
    %15 = vector.broadcast %cst_9 : f32 to vector<256x1xf32>
    %16 = arith.addf %13, %15 : vector<256x1xf32>
    %17 = math.rsqrt %16 : vector<256x1xf32>
    %18 = arith.mulf %14, %17 : vector<256x1xf32>
    %c0_10 = arith.constant 0 : index
    %c0_11 = arith.constant 0 : index
    %19 = vector.load %arg6[%c0_10, %c0_11] : memref<256x1xf32, #tpu.memory_space<vmem>>, vector<256x1xf32>
    %20 = arith.mulf %9, %18 : vector<256x1xf32>
    %21 = arith.subf %19, %20 : vector<256x1xf32>
    %c0_12 = arith.constant 0 : index
    %c0_13 = arith.constant 0 : index
    %22 = vector.load %arg2[%c0_12, %c0_13] : memref<256x256xbf16, #tpu.memory_space<vmem>>, vector<256x256xbf16>
    %23 = arith.extf %22 : vector<256x256xbf16> to vector<256x256xf32>
    %24 = vector.broadcast %18 : vector<256x1xf32> to vector<256x256xf32>
    %25 = arith.mulf %2, %24 : vector<256x256xf32>
    %26 = arith.addf %23, %25 : vector<256x256xf32>
    %27 = vector.broadcast %21 : vector<256x1xf32> to vector<256x256xf32>
    %28 = arith.addf %26, %27 : vector<256x256xf32>
    %cst_14 = arith.constant 0.000000e+00 : f32
    %29 = vector.broadcast %cst_14 : f32 to vector<256x256xf32>
    %30 = arith.maximumf %28, %29 : vector<256x256xf32>
    %c0_15 = arith.constant 0 : index
    %c0_16 = arith.constant 0 : index
    %31 = vector.load %arg4[%c0_15, %c0_16] : memref<256x256xbf16, #tpu.memory_space<vmem>>, vector<256x256xbf16>
    %32 = arith.truncf %30 : vector<256x256xf32> to vector<256x256xbf16>
    %cst_17 = arith.constant dense<0.000000e+00> : vector<256x256xf32>
    %33 = tpu.matmul %31, %32, %cst_17 {dimension_numbers = #tpu.dot_dimension_numbers<[1], [0], [0], [1], [0, 0, 1, 1], [], []>} : vector<256x256xbf16>, vector<256x256xbf16>, vector<256x256xf32> -> vector<256x256xf32>
    %c0_18 = arith.constant 0 : index
    %c0_19 = arith.constant 0 : index
    %34 = vector.load %arg7[%c0_18, %c0_19] : memref<256x256xf32, #tpu.memory_space<vmem>>, vector<256x256xf32>
    tpu.vector_store %arg7[%c0_18, %c0_19], %33 {strides = array<i32>} : memref<256x256xf32, #tpu.memory_space<vmem>>, vector<256x256xf32>,
    return
  }
  func.func @transform_0(%arg0: i32) -> (i32, i32) {
    %c0_i32 = arith.constant 0 : i32
    %c0_i32_0 = arith.constant 0 : i32
    %c0_i32_1 = arith.constant 0 : i32
    return %c0_i32, %c0_i32_0 : i32, i32
  }
  func.func @transform_1(%arg0: i32) -> (i32, i32) {
    %c0_i32 = arith.constant 0 : i32
    %c0_i32_0 = arith.constant 0 : i32
    %c0_i32_1 = arith.constant 0 : i32
    return %c0_i32, %c0_i32_0 : i32, i32
  }
  func.func @transform_2(%arg0: i32) -> (i32, i32) {
    %c0_i32 = arith.constant 0 : i32
    %c0_i32_0 = arith.constant 0 : i32
    %c0_i32_1 = arith.constant 0 : i32
    return %c0_i32, %c0_i32_0 : i32, i32
  }
  func.func @transform_3(%arg0: i32) -> (i32, i32) {
    %c0_i32 = arith.constant 0 : i32
    %c0_i32_0 = arith.constant 0 : i32
    %c0_i32_1 = arith.constant 0 : i32
    return %c0_i32, %c0_i32_0 : i32, i32
  }
  func.func @transform_4(%arg0: i32) -> (i32, i32) {
    %c0_i32 = arith.constant 0 : i32
    %c0_i32_0 = arith.constant 0 : i32
    %c0_i32_1 = arith.constant 0 : i32
    return %c0_i32, %c0_i32_0 : i32, i32
  }
  func.func @transform_5(%arg0: i32) -> (i32, i32) {
    %c0_i32 = arith.constant 0 : i32
    %c0_i32_0 = arith.constant 0 : i32
    %c0_i32_1 = arith.constant 0 : i32
    return %c0_i32, %c0_i32_0 : i32, i32
  }
  func.func @transform_6(%arg0: i32) -> (i32, i32) {
    %c0_i32 = arith.constant 0 : i32
    %c0_i32_0 = arith.constant 0 : i32
    %c0_i32_1 = arith.constant 0 : i32
    return %c0_i32, %c0_i32_0 : i32, i32
  }
}

</mosaic_0001>

<llo_original>
// kernel: fused_conv_bn_add_relu_conv.1
$region0: #{fused_conv_bn_add_relu_conv.1}
  #allocation0 [shape = 'u32[]', space=smem, size = 0x4, offset = 0x4, fixed_abs, tag = 'smem constant byte address 0x4 - core index']
  #allocation1 [shape = 'u32[144,128]{1,0:T(1,128)}', space=vmem, size = 0x12000, scoped, tag = 'internal scratch']
  %s0 = inlined_call_operand.vmem [shape: bf16[256,256], index: 0, kind: input, shape index: {}]
  %s1 = inlined_call_operand.vmem [shape: bf16[256,256], index: 1, kind: input, shape index: {}]
  %s2 = inlined_call_operand.vmem [shape: bf16[256,256], index: 2, kind: input, shape index: {}]
  %s3 = inlined_call_operand.vmem [shape: bf16[256,256], index: 3, kind: input, shape index: {}]
  %s4 = inlined_call_operand.vmem [shape: f32[256,1], index: 4, kind: input, shape index: {}]
  %s5 = inlined_call_operand.vmem [shape: f32[256,1], index: 5, kind: input, shape index: {}]
  %s6 = inlined_call_operand.vmem [shape: f32[256,256], index: 6, kind: output, shape index: {}]
  %s7 = sld [smem:[#allocation0]]
  $region34: #{fused_conv_bn_add_relu_conv.1} parent=0
    _
  %s9 = ssub.s32 1, %s7
  %s10 = scalar_select 0, %s9, %s7
  // Predicated region
  $region2: #{fused_conv_bn_add_relu_conv.1} parent=0 // pred_check
    _
  $region3: #{fused_conv_bn_add_relu_conv.1} parent=0 // pred_check_branch
    %12 = sbr.rel (0) target = $region5
  $region4: #{fused_conv_bn_add_relu_conv.1} parent=0 // pred_region
    _
  $region5: #{fused_conv_bn_add_relu_conv.1} parent=0 // pred_fallthru
    _
  // Predicated region
  $region6: #{fused_conv_bn_add_relu_conv.1} parent=0 // pred_check
    _
  $region7: #{fused_conv_bn_add_relu_conv.1} parent=0 // pred_check_branch
    %14 = sbr.rel (0) target = $region9
  $region8: #{fused_conv_bn_add_relu_conv.1} parent=0 // pred_region
    _
  $region9: #{fused_conv_bn_add_relu_conv.1} parent=0 // pred_fallthru
    _
  // Predicated region
  $region10: #{fused_conv_bn_add_relu_conv.1} parent=0 // pred_check
    _
  $region11: #{fused_conv_bn_add_relu_conv.1} parent=0 // pred_check_branch
    %16 = sbr.rel (0) target = $region13
  $region12: #{fused_conv_bn_add_relu_conv.1} parent=0 // pred_region
    _
  $region13: #{fused_conv_bn_add_relu_conv.1} parent=0 // pred_fallthru
    _
  // Predicated region
  $region14: #{fused_conv_bn_add_relu_conv.1} parent=0 // pred_check
    _
  $region15: #{fused_conv_bn_add_relu_conv.1} parent=0 // pred_check_branch
    %18 = sbr.rel (0) target = $region17
  $region16: #{fused_conv_bn_add_relu_conv.1} parent=0 // pred_region
    _
  $region17: #{fused_conv_bn_add_relu_conv.1} parent=0 // pred_fallthru
    _
  // Predicated region
  $region18: #{fused_conv_bn_add_relu_conv.1} parent=0 // pred_check
    _
  $region19: #{fused_conv_bn_add_relu_conv.1} parent=0 // pred_check_branch
    %20 = sbr.rel (0) target = $region21
  $region20: #{fused_conv_bn_add_relu_conv.1} parent=0 // pred_region
    _
  $region21: #{fused_conv_bn_add_relu_conv.1} parent=0 // pred_fallthru
    _
  // Predicated region
  $region22: #{fused_conv_bn_add_relu_conv.1} parent=0 // pred_check
    _
  $region23: #{fused_conv_bn_add_relu_conv.1} parent=0 // pred_check_branch
    %22 = sbr.rel (0) target = $region25
  $region24: #{fused_conv_bn_add_relu_conv.1} parent=0 // pred_region
    _
  $region25: #{fused_conv_bn_add_relu_conv.1} parent=0 // pred_fallthru
    _
  %v23 = vld [vmem:[%s2] sm:$0xff]
  %v24 = vld [vmem:[%s2 + $0x8] sm:$0xff]
  %v25 = vld [vmem:[%s2 + $0x10] sm:$0xff]
  %v26 = vld [vmem:[%s2 + $0x18] sm:$0xff]
  %v27 = vld [vmem:[%s2 + $0x20] sm:$0xff]
  %v28 = vld [vmem:[%s2 + $0x28] sm:$0xff]
  %v29 = vld [vmem:[%s2 + $0x30] sm:$0xff]
  %v30 = vld [vmem:[%s2 + $0x38] sm:$0xff]
  %v31 = vld [vmem:[%s2 + $0x40] sm:$0xff]
  %v32 = vld [vmem:[%s2 + $0x48] sm:$0xff]
  %v33 = vld [vmem:[%s2 + $0x50] sm:$0xff]
  %v34 = vld [vmem:[%s2 + $0x58] sm:$0xff]
  %v35 = vld [vmem:[%s2 + $0x60] sm:$0xff]
  %v36 = vld [vmem:[%s2 + $0x68] sm:$0xff]
  %v37 = vld [vmem:[%s2 + $0x70] sm:$0xff]
  %v38 = vld [vmem:[%s2 + $0x78] sm:$0xff]
  %v39 = vld [vmem:[%s2 + $0x80] sm:$0xff]
  %v40 = vld [vmem:[%s2 + $0x88] sm:$0xff]
  %v41 = vld [vmem:[%s2 + $0x90] sm:$0xff]
  %v42 = vld [vmem:[%s2 + $0x98] sm:$0xff]
  %v43 = vld [vmem:[%s2 + $0xa0] sm:$0xff]
  %v44 = vld [vmem:[%s2 + $0xa8] sm:$0xff]
  %v45 = vld [vmem:[%s2 + $0xb0] sm:$0xff]
  %v46 = vld [vmem:[%s2 + $0xb8] sm:$0xff]
  %v47 = vld [vmem:[%s2 + $0xc0] sm:$0xff]
  %v48 = vld [vmem:[%s2 + $0xc8] sm:$0xff]
  %v49 = vld [vmem:[%s2 + $0xd0] sm:$0xff]
  %v50 = vld [vmem:[%s2 + $0xd8] sm:$0xff]
  %v51 = vld [vmem:[%s2 + $0xe0] sm:$0xff]
  %v52 = vld [vmem:[%s2 + $0xe8] sm:$0xff]
  %v53 = vld [vmem:[%s2 + $0xf0] sm:$0xff]
  %v54 = vld [vmem:[%s2 + $0xf8] sm:$0xff]
  %v55 = vld [vmem:[%s0] sm:$0xff]
  %v56 = vld [vmem:[%s0 + $0x8] sm:$0xff]
  %v57 = vld [vmem:[%s0 + $0x10] sm:$0xff]
  %v58 = vld [vmem:[%s0 + $0x18] sm:$0xff]
  %v59 = vld [vmem:[%s0 + $0x20] sm:$0xff]
  %v60 = vld [vmem:[%s0 + $0x28] sm:$0xff]
  %v61 = vld [vmem:[%s0 + $0x30] sm:$0xff]
  %v62 = vld [vmem:[%s0 + $0x38] sm:$0xff]
  %v63 = vld [vmem:[%s0 + $0x40] sm:$0xff]
  %v64 = vld [vmem:[%s0 + $0x48] sm:$0xff]
  %v65 = vld [vmem:[%s0 + $0x50] sm:$0xff]
  %v66 = vld [vmem:[%s0 + $0x58] sm:$0xff]
  %v67 = vld [vmem:[%s0 + $0x60] sm:$0xff]
  %v68 = vld [vmem:[%s0 + $0x68] sm:$0xff]
  %v69 = vld [vmem:[%s0 + $0x70] sm:$0xff]
  %v70 = vld [vmem:[%s0 + $0x78] sm:$0xff]
  %v71 = vld [vmem:[%s0 + $0x80] sm:$0xff]
  %v72 = vld [vmem:[%s0 + $0x88] sm:$0xff]
  %v73 = vld [vmem:[%s0 + $0x90] sm:$0xff]
  %v74 = vld [vmem:[%s0 + $0x98] sm:$0xff]
  %v75 = vld [vmem:[%s0 + $0xa0] sm:$0xff]
  %v76 = vld [vmem:[%s0 + $0xa8] sm:$0xff]
  %v77 = vld [vmem:[%s0 + $0xb0] sm:$0xff]
  %v78 = vld [vmem:[%s0 + $0xb8] sm:$0xff]
  %v79 = vld [vmem:[%s0 + $0xc0] sm:$0xff]
  %v80 = vld [vmem:[%s0 + $0xc8] sm:$0xff]
  %v81 = vld [vmem:[%s0 + $0xd0] sm:$0xff]
  %v82 = vld [vmem:[%s0 + $0xd8] sm:$0xff]
  %v83 = vld [vmem:[%s0 + $0xe0] sm:$0xff]
  %v84 = vld [vmem:[%s0 + $0xe8] sm:$0xff]
  %v85 = vld [vmem:[%s0 + $0xf0] sm:$0xff]
  %v86 = vld [vmem:[%s0 + $0xf8] sm:$0xff]
  %v119 = vunpack.c.l.b16 %v23
  %v120 = vunpack.c.h.b16 %v23
  %v121 = vunpack.c.l.b16 %v24
  %v122 = vunpack.c.h.b16 %v24
  %v123 = vunpack.c.l.b16 %v25
  %v124 = vunpack.c.h.b16 %v25
  %v125 = vunpack.c.l.b16 %v26
  %v126 = vunpack.c.h.b16 %v26
  %v127 = vunpack.c.l.b16 %v27
  %v128 = vunpack.c.h.b16 %v27
  %v129 = vunpack.c.l.b16 %v28
  %v130 = vunpack.c.h.b16 %v28
  %v131 = vunpack.c.l.b16 %v29
  %v132 = vunpack.c.h.b16 %v29
  %v133 = vunpack.c.l.b16 %v30
  %v134 = vunpack.c.h.b16 %v30
  %v135 = vunpack.c.l.b16 %v31
  %v136 = vunpack.c.h.b16 %v31
  %v137 = vunpack.c.l.b16 %v32
  %v138 = vunpack.c.h.b16 %v32
  %v139 = vunpack.c.l.b16 %v33
  %v140 = vunpack.c.h.b16 %v33
  %v141 = vunpack.c.l.b16 %v34
  %v142 = vunpack.c.h.b16 %v34
  %v143 = vunpack.c.l.b16 %v35
  %v144 = vunpack.c.h.b16 %v35
  %v145 = vunpack.c.l.b16 %v36
  %v146 = vunpack.c.h.b16 %v36
  %v147 = vunpack.c.l.b16 %v37
  %v148 = vunpack.c.h.b16 %v37
  %v149 = vunpack.c.l.b16 %v38
  %v150 = vunpack.c.h.b16 %v38
  %v151 = vunpack.c.l.b16 %v39
  %v152 = vunpack.c.h.b16 %v39
  %v153 = vunpack.c.l.b16 %v40
  %v154 = vunpack.c.h.b16 %v40
  %v155 = vunpack.c.l.b16 %v41
  %v156 = vunpack.c.h.b16 %v41
  %v157 = vunpack.c.l.b16 %v42
  %v158 = vunpack.c.h.b16 %v42
  %v159 = vunpack.c.l.b16 %v43
  %v160 = vunpack.c.h.b16 %v43
  %v161 = vunpack.c.l.b16 %v44
  %v162 = vunpack.c.h.b16 %v44
  %v163 = vunpack.c.l.b16 %v45
  %v164 = vunpack.c.h.b16 %v45
  %v165 = vunpack.c.l.b16 %v46
  %v166 = vunpack.c.h.b16 %v46
  %v167 = vunpack.c.l.b16 %v47
  %v168 = vunpack.c.h.b16 %v47
  %v169 = vunpack.c.l.b16 %v48
  %v170 = vunpack.c.h.b16 %v48
  %v171 = vunpack.c.l.b16 %v49
  %v172 = vunpack.c.h.b16 %v49
  %v173 = vunpack.c.l.b16 %v50
  %v174 = vunpack.c.h.b16 %v50
  %v175 = vunpack.c.l.b16 %v51
  %v176 = vunpack.c.h.b16 %v51
  %v177 = vunpack.c.l.b16 %v52
  %v178 = vunpack.c.h.b16 %v52
  %v179 = vunpack.c.l.b16 %v53
  %v180 = vunpack.c.h.b16 %v53
  %v181 = vunpack.c.l.b16 %v54
  %v182 = vunpack.c.h.b16 %v54
  %v183 = vpack.c.b16 %v121, %v119
  %v184 = vpack.c.b16 %v122, %v120
  %v185 = vpack.c.b16 %v125, %v123
  %v186 = vpack.c.b16 %v126, %v124
  %v187 = vpack.c.b16 %v129, %v127
  %v188 = vpack.c.b16 %v130, %v128
  %v189 = vpack.c.b16 %v133, %v131
  %v190 = vpack.c.b16 %v134, %v132
  %v191 = vpack.c.b16 %v137, %v135
  %v192 = vpack.c.b16 %v138, %v136
  %v193 = vpack.c.b16 %v141, %v139
  %v194 = vpack.c.b16 %v142, %v140
  %v195 = vpack.c.b16 %v145, %v143
  %v196 = vpack.c.b16 %v146, %v144
  %v197 = vpack.c.b16 %v149, %v147
  %v198 = vpack.c.b16 %v150, %v148
  %v199 = vpack.c.b16 %v153, %v151
  %v200 = vpack.c.b16 %v154, %v152
  %v201 = vpack.c.b16 %v157, %v155
  %v202 = vpack.c.b16 %v158, %v156
  %v203 = vpack.c.b16 %v161, %v159
  %v204 = vpack.c.b16 %v162, %v160
  %v205 = vpack.c.b16 %v165, %v163
  %v206 = vpack.c.b16 %v166, %v164
  %v207 = vpack.c.b16 %v169, %v167
  %v208 = vpack.c.b16 %v170, %v168
  %v209 = vpack.c.b16 %v173, %v171
  %v210 = vpack.c.b16 %v174, %v172
  %v211 = vpack.c.b16 %v177, %v175
  %v212 = vpack.c.b16 %v178, %v176
  %v213 = vpack.c.b16 %v181, %v179
  %v214 = vpack.c.b16 %v182, %v180
  %v279 = vunpack.c.l.b16 %v55
  %v280 = vunpack.c.h.b16 %v55
  %v281 = vunpack.c.l.b16 %v56
  %v282 = vunpack.c.h.b16 %v56
  %v283 = vunpack.c.l.b16 %v57
  %v284 = vunpack.c.h.b16 %v57
  %v285 = vunpack.c.l.b16 %v58
  %v286 = vunpack.c.h.b16 %v58
  %v287 = vunpack.c.l.b16 %v59
  %v288 = vunpack.c.h.b16 %v59
  %v289 = vunpack.c.l.b16 %v60
  %v290 = vunpack.c.h.b16 %v60
  %v291 = vunpack.c.l.b16 %v61
  %v292 = vunpack.c.h.b16 %v61
  %v293 = vunpack.c.l.b16 %v62
  %v294 = vunpack.c.h.b16 %v62
  %v295 = vunpack.c.l.b16 %v63
  %v296 = vunpack.c.h.b16 %v63
  %v297 = vunpack.c.l.b16 %v64
  %v298 = vunpack.c.h.b16 %v64
  %v299 = vunpack.c.l.b16 %v65
  %v300 = vunpack.c.h.b16 %v65
  %v301 = vunpack.c.l.b16 %v66
  %v302 = vunpack.c.h.b16 %v66
  %v303 = vunpack.c.l.b16 %v67
  %v304 = vunpack.c.h.b16 %v67
  %v305 = vunpack.c.l.b16 %v68
  %v306 = vunpack.c.h.b16 %v68
  %v307 = vunpack.c.l.b16 %v69
  %v308 = vunpack.c.h.b16 %v69
  %v309 = vunpack.c.l.b16 %v70
  %v310 = vunpack.c.h.b16 %v70
  %v311 = vunpack.c.l.b16 %v71
  %v312 = vunpack.c.h.b16 %v71
  %v313 = vunpack.c.l.b16 %v72
  %v314 = vunpack.c.h.b16 %v72
  %v315 = vunpack.c.l.b16 %v73
  %v316 = vunpack.c.h.b16 %v73
  %v317 = vunpack.c.l.b16 %v74
  %v318 = vunpack.c.h.b16 %v74
  %v319 = vunpack.c.l.b16 %v75
  %v320 = vunpack.c.h.b16 %v75
  %v321 = vunpack.c.l.b16 %v76
  %v322 = vunpack.c.h.b16 %v76
  %v323 = vunpack.c.l.b16 %v77
  %v324 = vunpack.c.h.b16 %v77
  %v325 = vunpack.c.l.b16 %v78
  %v326 = vunpack.c.h.b16 %v78
  %v327 = vunpack.c.l.b16 %v79
  %v328 = vunpack.c.h.b16 %v79
  %v329 = vunpack.c.l.b16 %v80
  %v330 = vunpack.c.h.b16 %v80
  %v331 = vunpack.c.l.b16 %v81
  %v332 = vunpack.c.h.b16 %v81
  %v333 = vunpack.c.l.b16 %v82
  %v334 = vunpack.c.h.b16 %v82
  %v335 = vunpack.c.l.b16 %v83
  %v336 = vunpack.c.h.b16 %v83
  %v337 = vunpack.c.l.b16 %v84
  %v338 = vunpack.c.h.b16 %v84
  %v339 = vunpack.c.l.b16 %v85
  %v340 = vunpack.c.h.b16 %v85
  %v341 = vunpack.c.l.b16 %v86
  %v342 = vunpack.c.h.b16 %v86
  %v343 = vpack.c.b16 %v281, %v279
  %v344 = vpack.c.b16 %v282, %v280
  %v345 = vpack.c.b16 %v285, %v283
  %v346 = vpack.c.b16 %v286, %v284
  %v347 = vpack.c.b16 %v289, %v287
  %v348 = vpack.c.b16 %v290, %v288
  %v349 = vpack.c.b16 %v293, %v291
  %v350 = vpack.c.b16 %v294, %v292
  %v351 = vpack.c.b16 %v297, %v295
  %v352 = vpack.c.b16 %v298, %v296
  %v353 = vpack.c.b16 %v301, %v299
  %v354 = vpack.c.b16 %v302, %v300
  %v355 = vpack.c.b16 %v305, %v303
  %v356 = vpack.c.b16 %v306, %v304
  %v357 = vpack.c.b16 %v309, %v307
  %v358 = vpack.c.b16 %v310, %v308
  %v359 = vpack.c.b16 %v313, %v311
  %v360 = vpack.c.b16 %v314, %v312
  %v361 = vpack.c.b16 %v317, %v315
  %v362 = vpack.c.b16 %v318, %v316
  %v363 = vpack.c.b16 %v321, %v319
  %v364 = vpack.c.b16 %v322, %v320
  %v365 = vpack.c.b16 %v325, %v323
  %v366 = vpack.c.b16 %v326, %v324
  %v367 = vpack.c.b16 %v329, %v327
  %v368 = vpack.c.b16 %v330, %v328
  %v369 = vpack.c.b16 %v333, %v331
  %v370 = vpack.c.b16 %v334, %v332
  %v371 = vpack.c.b16 %v337, %v335
  %v372 = vpack.c.b16 %v338, %v336
  %v373 = vpack.c.b16 %v341, %v339
  %v374 = vpack.c.b16 %v342, %v340
  %407 = vmatprep.subr.bf16.mxu0 %v344
  %408 = vmatpush1.bf16.msra.mxu0 %v343
  %409 = vmatprep.subr.bf16.mxu0 %v346
  %410 = vmatpush1.bf16.msra.mxu0 %v345
  %411 = vmatprep.subr.bf16.mxu0 %v348
  %412 = vmatpush1.bf16.msra.mxu0 %v347
  %413 = vmatprep.subr.bf16.mxu0 %v350
  %414 = vmatpush1.bf16.msra.mxu0 %v349
  %415 = vmatprep.subr.bf16.mxu0 %v352
  %416 = vmatpush1.bf16.msra.mxu0 %v351
  %417 = vmatprep.subr.bf16.mxu0 %v354
  %418 = vmatpush1.bf16.msra.mxu0 %v353
  %419 = vmatprep.subr.bf16.mxu0 %v356
  %420 = vmatpush1.bf16.msra.mxu0 %v355
  %421 = vmatprep.subr.bf16.mxu0 %v358
  %422 = vmatpush1.bf16.msra.mxu0 %v357
  %423 = vmatprep.subr.bf16.mxu0 %v360
  %424 = vmatpush1.bf16.msra.mxu0 %v359
  %425 = vmatprep.subr.bf16.mxu0 %v362
  %426 = vmatpush1.bf16.msra.mxu0 %v361
  %427 = vmatprep.subr.bf16.mxu0 %v364
  %428 = vmatpush1.bf16.msra.mxu0 %v363
  %429 = vmatprep.subr.bf16.mxu0 %v366
  %430 = vmatpush1.bf16.msra.mxu0 %v365
  %431 = vmatprep.subr.bf16.mxu0 %v368
  %432 = vmatpush1.bf16.msra.mxu0 %v367
  %433 = vmatprep.subr.bf16.mxu0 %v370
  %434 = vmatpush1.bf16.msra.mxu0 %v369
  %435 = vmatprep.subr.bf16.mxu0 %v372
  %436 = vmatpush1.bf16.msra.mxu0 %v371
  %437 = vmatprep.subr.bf16.mxu0 %v374
  %438 = vmatpush1.bf16.msra.mxu0 %v373
  %439 = vmatprep.mubr.bf16.mxu0 %v184
  %440 = vmatmul.mubr.bf16.gmra.mrb[0].mxu0 %v183
  %v441 = vpop.f32.mrb[0].mxu0
  %v442 = vadd.f32 0.0, %v441
  %v443 = vpop.f32.mrb[0].mxu0
  %v444 = vadd.f32 0.0, %v443
  %v445 = vpop.f32.mrb[0].mxu0
  %v446 = vadd.f32 0.0, %v445
  %v447 = vpop.f32.mrb[0].mxu0
  %v448 = vadd.f32 0.0, %v447
  %449 = vmatprep.mubr.bf16.mxu0 %v186
  %450 = vmatmul.mubr.bf16.gmra.mrb[0].mxu0 %v185
  %v451 = vpop.f32.mrb[0].mxu0
  %v452 = vadd.f32 0.0, %v451
  %v453 = vpop.f32.mrb[0].mxu0
  %v454 = vadd.f32 0.0, %v453
  %v455 = vpop.f32.mrb[0].mxu0
  %v456 = vadd.f32 0.0, %v455
  %v457 = vpop.f32.mrb[0].mxu0
  %v458 = vadd.f32 0.0, %v457
  %459 = vmatprep.mubr.bf16.mxu0 %v188
  %460 = vmatmul.mubr.bf16.gmra.mrb[0].mxu0 %v187
  %v461 = vpop.f32.mrb[0].mxu0
  %v462 = vadd.f32 0.0, %v461
  %v463 = vpop.f32.mrb[0].mxu0
  %v464 = vadd.f32 0.0, %v463
  %v465 = vpop.f32.mrb[0].mxu0
  %v466 = vadd.f32 0.0, %v465
  %v467 = vpop.f32.mrb[0].mxu0
  %v468 = vadd.f32 0.0, %v467
  %469 = vmatprep.mubr.bf16.mxu0 %v190
  %470 = vmatmul.mubr.bf16.gmra.mrb[0].mxu0 %v189
  %v471 = vpop.f32.mrb[0].mxu0
  %v472 = vadd.f32 0.0, %v471
  %v473 = vpop.f32.mrb[0].mxu0
  %v474 = vadd.f32 0.0, %v473
  %v475 = vpop.f32.mrb[0].mxu0
  %v476 = vadd.f32 0.0, %v475
  %v477 = vpop.f32.mrb[0].mxu0
  %v478 = vadd.f32 0.0, %v477
  %479 = vmatprep.mubr.bf16.mxu0 %v192
  %480 = vmatmul.mubr.bf16.gmra.mrb[0].mxu0 %v191
  %v481 = vpop.f32.mrb[0].mxu0
  %v482 = vadd.f32 0.0, %v481
  %v483 = vpop.f32.mrb[0].mxu0
  %v484 = vadd.f32 0.0, %v483
  %v485 = vpop.f32.mrb[0].mxu0
  %v486 = vadd.f32 0.0, %v485
  %v487 = vpop.f32.mrb[0].mxu0
  %v488 = vadd.f32 0.0, %v487
  %489 = vmatprep.mubr.bf16.mxu0 %v194
  %490 = vmatmul.mubr.bf16.gmra.mrb[0].mxu0 %v193
  %v491 = vpop.f32.mrb[0].mxu0
  %v492 = vadd.f32 0.0, %v491
  %v493 = vpop.f32.mrb[0].mxu0
  %v494 = vadd.f32 0.0, %v493
  %v495 = vpop.f32.mrb[0].mxu0
  %v496 = vadd.f32 0.0, %v495
  %v497 = vpop.f32.mrb[0].mxu0
  %v498 = vadd.f32 0.0, %v497
  %499 = vmatprep.mubr.bf16.mxu0 %v196
  %500 = vmatmul.mubr.bf16.gmra.mrb[0].mxu0 %v195
  %v501 = vpop.f32.mrb[0].mxu0
  %v502 = vadd.f32 0.0, %v501
  %v503 = vpop.f32.mrb[0].mxu0
  %v504 = vadd.f32 0.0, %v503
  %v505 = vpop.f32.mrb[0].mxu0
  %v506 = vadd.f32 0.0, %v505
  %v507 = vpop.f32.mrb[0].mxu0
  %v508 = vadd.f32 0.0, %v507
  %509 = vmatprep.mubr.bf16.mxu0 %v198
  %510 = vmatmul.mubr.bf16.gmra.mrb[0].mxu0 %v197
  %v511 = vpop.f32.mrb[0].mxu0
  %v512 = vadd.f32 0.0, %v511
  %v513 = vpop.f32.mrb[0].mxu0
  %v514 = vadd.f32 0.0, %v513
  %v515 = vpop.f32.mrb[0].mxu0
  %v516 = vadd.f32 0.0, %v515
  %v517 = vpop.f32.mrb[0].mxu0
  %v518 = vadd.f32 0.0, %v517
  %519 = vmatprep.mubr.bf16.mxu0 %v200
  %520 = vmatmul.mubr.bf16.gmra.mrb[0].mxu0 %v199
  %v521 = vpop.f32.mrb[0].mxu0
  %v522 = vadd.f32 0.0, %v521
  %v523 = vpop.f32.mrb[0].mxu0
  %v524 = vadd.f32 0.0, %v523
  %v525 = vpop.f32.mrb[0].mxu0
  %v526 = vadd.f32 0.0, %v525
  %v527 = vpop.f32.mrb[0].mxu0
  %v528 = vadd.f32 0.0, %v527
  %529 = vmatprep.mubr.bf16.mxu0 %v202
  %530 = vmatmul.mubr.bf16.gmra.mrb[0].mxu0 %v201
  %v531 = vpop.f32.mrb[0].mxu0
  %v532 = vadd.f32 0.0, %v531
  %v533 = vpop.f32.mrb[0].mxu0
  %v534 = vadd.f32 0.0, %v533
  %v535 = vpop.f32.mrb[0].mxu0
  %v536 = vadd.f32 0.0, %v535
  %v537 = vpop.f32.mrb[0].mxu0
  %v538 = vadd.f32 0.0, %v537
  %539 = vmatprep.mubr.bf16.mxu0 %v204
  %540 = vmatmul.mubr.bf16.gmra.mrb[0].mxu0 %v203
  %v541 = vpop.f32.mrb[0].mxu0
  %v542 = vadd.f32 0.0, %v541
  %v543 = vpop.f32.mrb[0].mxu0
  %v544 = vadd.f32 0.0, %v543
  %v545 = vpop.f32.mrb[0].mxu0
  %v546 = vadd.f32 0.0, %v545
  %v547 = vpop.f32.mrb[0].mxu0
  %v548 = vadd.f32 0.0, %v547
  %549 = vmatprep.mubr.bf16.mxu0 %v206
  %550 = vmatmul.mubr.bf16.gmra.mrb[0].mxu0 %v205
  %v551 = vpop.f32.mrb[0].mxu0
  %v552 = vadd.f32 0.0, %v551
  %v553 = vpop.f32.mrb[0].mxu0
  %v554 = vadd.f32 0.0, %v553
  %v555 = vpop.f32.mrb[0].mxu0
  %v556 = vadd.f32 0.0, %v555
  %v557 = vpop.f32.mrb[0].mxu0
  %v558 = vadd.f32 0.0, %v557
  %559 = vmatprep.mubr.bf16.mxu0 %v208
  %560 = vmatmul.mubr.bf16.gmra.mrb[0].mxu0 %v207
  %v561 = vpop.f32.mrb[0].mxu0
  %v562 = vadd.f32 0.0, %v561
  %v563 = vpop.f32.mrb[0].mxu0
  %v564 = vadd.f32 0.0, %v563
  %v565 = vpop.f32.mrb[0].mxu0
  %v566 = vadd.f32 0.0, %v565
  %v567 = vpop.f32.mrb[0].mxu0
  %v568 = vadd.f32 0.0, %v567
  %569 = vmatprep.mubr.bf16.mxu0 %v210
  %570 = vmatmul.mubr.bf16.gmra.mrb[0].mxu0 %v209
  %v571 = vpop.f32.mrb[0].mxu0
  %v572 = vadd.f32 0.0, %v571
  %v573 = vpop.f32.mrb[0].mxu0
  %v574 = vadd.f32 0.0, %v573
  %v575 = vpop.f32.mrb[0].mxu0
  %v576 = vadd.f32 0.0, %v575
  %v577 = vpop.f32.mrb[0].mxu0
  %v578 = vadd.f32 0.0, %v577
  %579 = vmatprep.mubr.bf16.mxu0 %v212
  %580 = vmatmul.mubr.bf16.gmra.mrb[0].mxu0 %v211
  %v581 = vpop.f32.mrb[0].mxu0
  %v582 = vadd.f32 0.0, %v581
  %v583 = vpop.f32.mrb[0].mxu0
  %v584 = vadd.f32 0.0, %v583
  %v585 = vpop.f32.mrb[0].mxu0
  %v586 = vadd.f32 0.0, %v585
  %v587 = vpop.f32.mrb[0].mxu0
  %v588 = vadd.f32 0.0, %v587
  %589 = vmatprep.mubr.bf16.mxu0 %v214
  %590 = vmatmul.mubr.bf16.gmra.mrb[0].mxu0 %v213
  %v591 = vpop.f32.mrb[0].mxu0
  %v592 = vadd.f32 0.0, %v591
  %v593 = vpop.f32.mrb[0].mxu0
  %v594 = vadd.f32 0.0, %v593
  %v595 = vpop.f32.mrb[0].mxu0
  %v596 = vadd.f32 0.0, %v595
  %v597 = vpop.f32.mrb[0].mxu0
  %v598 = vadd.f32 0.0, %v597
  %599 = vdwg.mxu0
  %v600 = vadd.f32 %v442, %v444
  %601 = vadd.xlane.f32.xlu0 %v600
  %v602 = vpop.xlane.xlu0 %601
  %v603 = vadd.f32 %v446, %v448
  %604 = vadd.xlane.f32.xlu0 %v603
  %v605 = vpop.xlane.xlu0 %604
  %v606 = vadd.f32 %v452, %v454
  %607 = vadd.xlane.f32.xlu0 %v606
  %v608 = vpop.xlane.xlu0 %607
  %v609 = vadd.f32 %v456, %v458
  %610 = vadd.xlane.f32.xlu0 %v609
  %v611 = vpop.xlane.xlu0 %610
  %v612 = vadd.f32 %v462, %v464
  %613 = vadd.xlane.f32.xlu0 %v612
  %v614 = vpop.xlane.xlu0 %613
  %v615 = vadd.f32 %v466, %v468
  %616 = vadd.xlane.f32.xlu0 %v615
  %v617 = vpop.xlane.xlu0 %616
  %v618 = vadd.f32 %v472, %v474
  %619 = vadd.xlane.f32.xlu0 %v618
  %v620 = vpop.xlane.xlu0 %619
  %v621 = vadd.f32 %v476, %v478
  %622 = vadd.xlane.f32.xlu0 %v621
  %v623 = vpop.xlane.xlu0 %622
  %v624 = vadd.f32 %v482, %v484
  %625 = vadd.xlane.f32.xlu0 %v624
  %v626 = vpop.xlane.xlu0 %625
  %v627 = vadd.f32 %v486, %v488
  %628 = vadd.xlane.f32.xlu0 %v627
  %v629 = vpop.xlane.xlu0 %628
  %v630 = vadd.f32 %v492, %v494
  %631 = vadd.xlane.f32.xlu0 %v630
  %v632 = vpop.xlane.xlu0 %631
  %v633 = vadd.f32 %v496, %v498
  %634 = vadd.xlane.f32.xlu0 %v633
  %v635 = vpop.xlane.xlu0 %634
  %v636 = vadd.f32 %v502, %v504
  %637 = vadd.xlane.f32.xlu0 %v636
  %v638 = vpop.xlane.xlu0 %637
  %v639 = vadd.f32 %v506, %v508
  %640 = vadd.xlane.f32.xlu0 %v639
  %v641 = vpop.xlane.xlu0 %640
  %v642 = vadd.f32 %v512, %v514
  %643 = vadd.xlane.f32.xlu0 %v642
  %v644 = vpop.xlane.xlu0 %643
  %v645 = vadd.f32 %v516, %v518
  %646 = vadd.xlane.f32.xlu0 %v645
  %v647 = vpop.xlane.xlu0 %646
  %v648 = vadd.f32 %v522, %v524
  %649 = vadd.xlane.f32.xlu0 %v648
  %v650 = vpop.xlane.xlu0 %649
  %v651 = vadd.f32 %v526, %v528
  %652 = vadd.xlane.f32.xlu0 %v651
  %v653 = vpop.xlane.xlu0 %652
  %v654 = vadd.f32 %v532, %v534
  %655 = vadd.xlane.f32.xlu0 %v654
  %v656 = vpop.xlane.xlu0 %655
  %v657 = vadd.f32 %v536, %v538
  %658 = vadd.xlane.f32.xlu0 %v657
  %v659 = vpop.xlane.xlu0 %658
  %v660 = vadd.f32 %v542, %v544
  %661 = vadd.xlane.f32.xlu0 %v660
  %v662 = vpop.xlane.xlu0 %661
  %v663 = vadd.f32 %v546, %v548
  %664 = vadd.xlane.f32.xlu0 %v663
  %v665 = vpop.xlane.xlu0 %664
  %v666 = vadd.f32 %v552, %v554
  %667 = vadd.xlane.f32.xlu0 %v666
  %v668 = vpop.xlane.xlu0 %667
  %v669 = vadd.f32 %v556, %v558
  %670 = vadd.xlane.f32.xlu0 %v669
  %v671 = vpop.xlane.xlu0 %670
  %v672 = vadd.f32 %v562, %v564
  %673 = vadd.xlane.f32.xlu0 %v672
  %v674 = vpop.xlane.xlu0 %673
  %v675 = vadd.f32 %v566, %v568
  %676 = vadd.xlane.f32.xlu0 %v675
  %v677 = vpop.xlane.xlu0 %676
  %v678 = vadd.f32 %v572, %v574
  %679 = vadd.xlane.f32.xlu0 %v678
  %v680 = vpop.xlane.xlu0 %679
  %v681 = vadd.f32 %v576, %v578
  %682 = vadd.xlane.f32.xlu0 %v681
  %v683 = vpop.xlane.xlu0 %682
  %v684 = vadd.f32 %v582, %v584
  %685 = vadd.xlane.f32.xlu0 %v684
  %v686 = vpop.xlane.xlu0 %685
  %v687 = vadd.f32 %v586, %v588
  %688 = vadd.xlane.f32.xlu0 %v687
  %v689 = vpop.xlane.xlu0 %688
  %v690 = vadd.f32 %v592, %v594
  %691 = vadd.xlane.f32.xlu0 %v690
  %v692 = vpop.xlane.xlu0 %691
  %v693 = vadd.f32 %v596, %v598
  %694 = vadd.xlane.f32.xlu0 %v693
  %v695 = vpop.xlane.xlu0 %694
  %v696 = vmul.f32 %v442, %v442
  %v697 = vmul.f32 %v444, %v444
  %v698 = vmul.f32 %v446, %v446
  %v699 = vmul.f32 %v448, %v448
  %v700 = vmul.f32 %v452, %v452
  %v701 = vmul.f32 %v454, %v454
  %v702 = vmul.f32 %v456, %v456
  %v703 = vmul.f32 %v458, %v458
  %v704 = vmul.f32 %v462, %v462
  %v705 = vmul.f32 %v464, %v464
  %v706 = vmul.f32 %v466, %v466
  %v707 = vmul.f32 %v468, %v468
  %v708 = vmul.f32 %v472, %v472
  %v709 = vmul.f32 %v474, %v474
  %v710 = vmul.f32 %v476, %v476
  %v711 = vmul.f32 %v478, %v478
  %v712 = vmul.f32 %v482, %v482
  %v713 = vmul.f32 %v484, %v484
  %v714 = vmul.f32 %v486, %v486
  %v715 = vmul.f32 %v488, %v488
  %v716 = vmul.f32 %v492, %v492
  %v717 = vmul.f32 %v494, %v494
  %v718 = vmul.f32 %v496, %v496
  %v719 = vmul.f32 %v498, %v498
  %v720 = vmul.f32 %v502, %v502
  %v721 = vmul.f32 %v504, %v504
  %v722 = vmul.f32 %v506, %v506
  %v723 = vmul.f32 %v508, %v508
  %v724 = vmul.f32 %v512, %v512
  %v725 = vmul.f32 %v514, %v514
  %v726 = vmul.f32 %v516, %v516
  %v727 = vmul.f32 %v518, %v518
  %v728 = vmul.f32 %v522, %v522
  %v729 = vmul.f32 %v524, %v524
  %v730 = vmul.f32 %v526, %v526
  %v731 = vmul.f32 %v528, %v528
  %v732 = vmul.f32 %v532, %v532
  %v733 = vmul.f32 %v534, %v534
  %v734 = vmul.f32 %v536, %v536
  %v735 = vmul.f32 %v538, %v538
  %v736 = vmul.f32 %v542, %v542
  %v737 = vmul.f32 %v544, %v544
  %v738 = vmul.f32 %v546, %v546
  %v739 = vmul.f32 %v548, %v548
  %v740 = vmul.f32 %v552, %v552
  %v741 = vmul.f32 %v554, %v554
  %v742 = vmul.f32 %v556, %v556
  %v743 = vmul.f32 %v558, %v558
  %v744 = vmul.f32 %v562, %v562
  %v745 = vmul.f32 %v564, %v564
  %v746 = vmul.f32 %v566, %v566
  %v747 = vmul.f32 %v568, %v568
  %v748 = vmul.f32 %v572, %v572
  %v749 = vmul.f32 %v574, %v574
  %v750 = vmul.f32 %v576, %v576
  %v751 = vmul.f32 %v578, %v578
  %v752 = vmul.f32 %v582, %v582
  %v753 = vmul.f32 %v584, %v584
  %v754 = vmul.f32 %v586, %v586
  %v755 = vmul.f32 %v588, %v588
  %v756 = vmul.f32 %v592, %v592
  %v757 = vmul.f32 %v594, %v594
  %v758 = vmul.f32 %v596, %v596
  %v759 = vmul.f32 %v598, %v598
  %v760 = vadd.f32 %v696, %v697
  %761 = vadd.xlane.f32.xlu0 %v760
  %v762 = vpop.xlane.xlu0 %761
  %v763 = vadd.f32 %v698, %v699
  %764 = vadd.xlane.f32.xlu0 %v763
  %v765 = vpop.xlane.xlu0 %764
  %v766 = vadd.f32 %v700, %v701
  %767 = vadd.xlane.f32.xlu0 %v766
  %v768 = vpop.xlane.xlu0 %767
  %v769 = vadd.f32 %v702, %v703
  %770 = vadd.xlane.f32.xlu0 %v769
  %v771 = vpop.xlane.xlu0 %770
  %v772 = vadd.f32 %v704, %v705
  %773 = vadd.xlane.f32.xlu0 %v772
  %v774 = vpop.xlane.xlu0 %773
  %v775 = vadd.f32 %v706, %v707
  %776 = vadd.xlane.f32.xlu0 %v775
  %v777 = vpop.xlane.xlu0 %776
  %v778 = vadd.f32 %v708, %v709
  %779 = vadd.xlane.f32.xlu0 %v778
  %v780 = vpop.xlane.xlu0 %779
  %v781 = vadd.f32 %v710, %v711
  %782 = vadd.xlane.f32.xlu0 %v781
  %v783 = vpop.xlane.xlu0 %782
  %v784 = vadd.f32 %v712, %v713
  %785 = vadd.xlane.f32.xlu0 %v784
  %v786 = vpop.xlane.xlu0 %785
  %v787 = vadd.f32 %v714, %v715
  %788 = vadd.xlane.f32.xlu0 %v787
  %v789 = vpop.xlane.xlu0 %788
  %v790 = vadd.f32 %v716, %v717
  %791 = vadd.xlane.f32.xlu0 %v790
  %v792 = vpop.xlane.xlu0 %791
  %v793 = vadd.f32 %v718, %v719
  %794 = vadd.xlane.f32.xlu0 %v793
  %v795 = vpop.xlane.xlu0 %794
  %v796 = vadd.f32 %v720, %v721
  %797 = vadd.xlane.f32.xlu0 %v796
  %v798 = vpop.xlane.xlu0 %797
  %v799 = vadd.f32 %v722, %v723
  %800 = vadd.xlane.f32.xlu0 %v799
  %v801 = vpop.xlane.xlu0 %800
  %v802 = vadd.f32 %v724, %v725
  %803 = vadd.xlane.f32.xlu0 %v802
  %v804 = vpop.xlane.xlu0 %803
  %v805 = vadd.f32 %v726, %v727
  %806 = vadd.xlane.f32.xlu0 %v805
  %v807 = vpop.xlane.xlu0 %806
  %v808 = vadd.f32 %v728, %v729
  %809 = vadd.xlane.f32.xlu0 %v808
  %v810 = vpop.xlane.xlu0 %809
  %v811 = vadd.f32 %v730, %v731
  %812 = vadd.xlane.f32.xlu0 %v811
  %v813 = vpop.xlane.xlu0 %812
  %v814 = vadd.f32 %v732, %v733
  %815 = vadd.xlane.f32.xlu0 %v814
  %v816 = vpop.xlane.xlu0 %815
  %v817 = vadd.f32 %v734, %v735
  %818 = vadd.xlane.f32.xlu0 %v817
  %v819 = vpop.xlane.xlu0 %818
  %v820 = vadd.f32 %v736, %v737
  %821 = vadd.xlane.f32.xlu0 %v820
  %v822 = vpop.xlane.xlu0 %821
  %v823 = vadd.f32 %v738, %v739
  %824 = vadd.xlane.f32.xlu0 %v823
  %v825 = vpop.xlane.xlu0 %824
  %v826 = vadd.f32 %v740, %v741
  %827 = vadd.xlane.f32.xlu0 %v826
  %v828 = vpop.xlane.xlu0 %827
  %v829 = vadd.f32 %v742, %v743
  %830 = vadd.xlane.f32.xlu0 %v829
  %v831 = vpop.xlane.xlu0 %830
  %v832 = vadd.f32 %v744, %v745
  %833 = vadd.xlane.f32.xlu0 %v832
  %v834 = vpop.xlane.xlu0 %833
  %v835 = vadd.f32 %v746, %v747
  %836 = vadd.xlane.f32.xlu0 %v835
  %v837 = vpop.xlane.xlu0 %836
  %v838 = vadd.f32 %v748, %v749
  %839 = vadd.xlane.f32.xlu0 %v838
  %v840 = vpop.xlane.xlu0 %839
  %v841 = vadd.f32 %v750, %v751
  %842 = vadd.xlane.f32.xlu0 %v841
  %v843 = vpop.xlane.xlu0 %842
  %v844 = vadd.f32 %v752, %v753
  %845 = vadd.xlane.f32.xlu0 %v844
  %v846 = vpop.xlane.xlu0 %845
  %v847 = vadd.f32 %v754, %v755
  %848 = vadd.xlane.f32.xlu0 %v847
  %v849 = vpop.xlane.xlu0 %848
  %v850 = vadd.f32 %v756, %v757
  %851 = vadd.xlane.f32.xlu0 %v850
  %v852 = vpop.xlane.xlu0 %851
  %v853 = vadd.f32 %v758, %v759
  %854 = vadd.xlane.f32.xlu0 %v853
  %v855 = vpop.xlane.xlu0 %854
  %v856 = vmul.f32 %v602, 0.0051020407
  %v857 = vmul.f32 %v605, 0.0051020407
  %v858 = vmul.f32 %v608, 0.0051020407
  %v859 = vmul.f32 %v611, 0.0051020407
  %v860 = vmul.f32 %v614, 0.0051020407
  %v861 = vmul.f32 %v617, 0.0051020407
  %v862 = vmul.f32 %v620, 0.0051020407
  %v863 = vmul.f32 %v623, 0.0051020407
  %v864 = vmul.f32 %v626, 0.0051020407
  %v865 = vmul.f32 %v629, 0.0051020407
  %v866 = vmul.f32 %v632, 0.0051020407
  %v867 = vmul.f32 %v635, 0.0051020407
  %v868 = vmul.f32 %v638, 0.0051020407
  %v869 = vmul.f32 %v641, 0.0051020407
  %v870 = vmul.f32 %v644, 0.0051020407
  %v871 = vmul.f32 %v647, 0.0051020407
  %v872 = vmul.f32 %v650, 0.0051020407
  %v873 = vmul.f32 %v653, 0.0051020407
  %v874 = vmul.f32 %v656, 0.0051020407
  %v875 = vmul.f32 %v659, 0.0051020407
  %v876 = vmul.f32 %v662, 0.0051020407
  %v877 = vmul.f32 %v665, 0.0051020407
  %v878 = vmul.f32 %v668, 0.0051020407
  %v879 = vmul.f32 %v671, 0.0051020407
  %v880 = vmul.f32 %v674, 0.0051020407
  %v881 = vmul.f32 %v677, 0.0051020407
  %v882 = vmul.f32 %v680, 0.0051020407
  %v883 = vmul.f32 %v683, 0.0051020407
  %v884 = vmul.f32 %v686, 0.0051020407
  %v885 = vmul.f32 %v689, 0.0051020407
  %v886 = vmul.f32 %v692, 0.0051020407
  %v887 = vmul.f32 %v695, 0.0051020407
  %v888 = vmul.f32 %v762, 0.0051020407
  %v889 = vmul.f32 %v765, 0.0051020407
  %v890 = vmul.f32 %v768, 0.0051020407
  %v891 = vmul.f32 %v771, 0.0051020407
  %v892 = vmul.f32 %v774, 0.0051020407
  %v893 = vmul.f32 %v777, 0.0051020407
  %v894 = vmul.f32 %v780, 0.0051020407
  %v895 = vmul.f32 %v783, 0.0051020407
  %v896 = vmul.f32 %v786, 0.0051020407
  %v897 = vmul.f32 %v789, 0.0051020407
  %v898 = vmul.f32 %v792, 0.0051020407
  %v899 = vmul.f32 %v795, 0.0051020407
  %v900 = vmul.f32 %v798, 0.0051020407
  %v901 = vmul.f32 %v801, 0.0051020407
  %v902 = vmul.f32 %v804, 0.0051020407
  %v903 = vmul.f32 %v807, 0.0051020407
  %v904 = vmul.f32 %v810, 0.0051020407
  %v905 = vmul.f32 %v813, 0.0051020407
  %v906 = vmul.f32 %v816, 0.0051020407
  %v907 = vmul.f32 %v819, 0.0051020407
  %v908 = vmul.f32 %v822, 0.0051020407
  %v909 = vmul.f32 %v825, 0.0051020407
  %v910 = vmul.f32 %v828, 0.0051020407
  %v911 = vmul.f32 %v831, 0.0051020407
  %v912 = vmul.f32 %v834, 0.0051020407
  %v913 = vmul.f32 %v837, 0.0051020407
  %v914 = vmul.f32 %v840, 0.0051020407
  %v915 = vmul.f32 %v843, 0.0051020407
  %v916 = vmul.f32 %v846, 0.0051020407
  %v917 = vmul.f32 %v849, 0.0051020407
  %v918 = vmul.f32 %v852, 0.0051020407
  %v919 = vmul.f32 %v855, 0.0051020407
  %v920 = vmul.f32 %v856, %v856
  %v921 = vmul.f32 %v857, %v857
  %v922 = vmul.f32 %v858, %v858
  %v923 = vmul.f32 %v859, %v859
  %v924 = vmul.f32 %v860, %v860
  %v925 = vmul.f32 %v861, %v861
  %v926 = vmul.f32 %v862, %v862
  %v927 = vmul.f32 %v863, %v863
  %v928 = vmul.f32 %v864, %v864
  %v929 = vmul.f32 %v865, %v865
  %v930 = vmul.f32 %v866, %v866
  %v931 = vmul.f32 %v867, %v867
  %v932 = vmul.f32 %v868, %v868
  %v933 = vmul.f32 %v869, %v869
  %v934 = vmul.f32 %v870, %v870
  %v935 = vmul.f32 %v871, %v871
  %v936 = vmul.f32 %v872, %v872
  %v937 = vmul.f32 %v873, %v873
  %v938 = vmul.f32 %v874, %v874
  %v939 = vmul.f32 %v875, %v875
  %v940 = vmul.f32 %v876, %v876
  %v941 = vmul.f32 %v877, %v877
  %v942 = vmul.f32 %v878, %v878
  %v943 = vmul.f32 %v879, %v879
  %v944 = vmul.f32 %v880, %v880
  %v945 = vmul.f32 %v881, %v881
  %v946 = vmul.f32 %v882, %v882
  %v947 = vmul.f32 %v883, %v883
  %v948 = vmul.f32 %v884, %v884
  %v949 = vmul.f32 %v885, %v885
  %v950 = vmul.f32 %v886, %v886
  %v951 = vmul.f32 %v887, %v887
  %v952 = vsub.f32 %v888, %v920
  %v953 = vsub.f32 %v889, %v921
  %v954 = vsub.f32 %v890, %v922
  %v955 = vsub.f32 %v891, %v923
  %v956 = vsub.f32 %v892, %v924
  %v957 = vsub.f32 %v893, %v925
  %v958 = vsub.f32 %v894, %v926
  %v959 = vsub.f32 %v895, %v927
  %v960 = vsub.f32 %v896, %v928
  %v961 = vsub.f32 %v897, %v929
  %v962 = vsub.f32 %v898, %v930
  %v963 = vsub.f32 %v899, %v931
  %v964 = vsub.f32 %v900, %v932
  %v965 = vsub.f32 %v901, %v933
  %v966 = vsub.f32 %v902, %v934
  %v967 = vsub.f32 %v903, %v935
  %v968 = vsub.f32 %v904, %v936
  %v969 = vsub.f32 %v905, %v937
  %v970 = vsub.f32 %v906, %v938
  %v971 = vsub.f32 %v907, %v939
  %v972 = vsub.f32 %v908, %v940
  %v973 = vsub.f32 %v909, %v941
  %v974 = vsub.f32 %v910, %v942
  %v975 = vsub.f32 %v911, %v943
  %v976 = vsub.f32 %v912, %v944
  %v977 = vsub.f32 %v913, %v945
  %v978 = vsub.f32 %v914, %v946
  %v979 = vsub.f32 %v915, %v947
  %v980 = vsub.f32 %v916, %v948
  %v981 = vsub.f32 %v917, %v949
  %v982 = vsub.f32 %v918, %v950
  %v983 = vsub.f32 %v919, %v951
  %v984 = vld [vmem:[%s4] sm:$0xff]
  %v985 = vld [vmem:[%s4 + $0x8] sm:$0xff]
  %v986 = vld [vmem:[%s4 + $0x10] sm:$0xff]
  %v987 = vld [vmem:[%s4 + $0x18] sm:$0xff]
  %v988 = vld [vmem:[%s4 + $0x20] sm:$0xff]
  %v989 = vld [vmem:[%s4 + $0x28] sm:$0xff]
  %v990 = vld [vmem:[%s4 + $0x30] sm:$0xff]
  %v991 = vld [vmem:[%s4 + $0x38] sm:$0xff]
  %v992 = vld [vmem:[%s4 + $0x40] sm:$0xff]
  %v993 = vld [vmem:[%s4 + $0x48] sm:$0xff]
  %v994 = vld [vmem:[%s4 + $0x50] sm:$0xff]
  %v995 = vld [vmem:[%s4 + $0x58] sm:$0xff]
  %v996 = vld [vmem:[%s4 + $0x60] sm:$0xff]
  %v997 = vld [vmem:[%s4 + $0x68] sm:$0xff]
  %v998 = vld [vmem:[%s4 + $0x70] sm:$0xff]
  %v999 = vld [vmem:[%s4 + $0x78] sm:$0xff]
  %v1000 = vld [vmem:[%s4 + $0x80] sm:$0xff]
  %v1001 = vld [vmem:[%s4 + $0x88] sm:$0xff]
  %v1002 = vld [vmem:[%s4 + $0x90] sm:$0xff]
  %v1003 = vld [vmem:[%s4 + $0x98] sm:$0xff]
  %v1004 = vld [vmem:[%s4 + $0xa0] sm:$0xff]
  %v1005 = vld [vmem:[%s4 + $0xa8] sm:$0xff]
  %v1006 = vld [vmem:[%s4 + $0xb0] sm:$0xff]
  %v1007 = vld [vmem:[%s4 + $0xb8] sm:$0xff]
  %v1008 = vld [vmem:[%s4 + $0xc0] sm:$0xff]
  %v1009 = vld [vmem:[%s4 + $0xc8] sm:$0xff]
  %v1010 = vld [vmem:[%s4 + $0xd0] sm:$0xff]
  %v1011 = vld [vmem:[%s4 + $0xd8] sm:$0xff]
  %v1012 = vld [vmem:[%s4 + $0xe0] sm:$0xff]
  %v1013 = vld [vmem:[%s4 + $0xe8] sm:$0xff]
  %v1014 = vld [vmem:[%s4 + $0xf0] sm:$0xff]
  %v1015 = vld [vmem:[%s4 + $0xf8] sm:$0xff]
  %v1016 = vadd.f32 %v952, 1e-05
  %v1017 = vadd.f32 %v953, 1e-05
  %v1018 = vadd.f32 %v954, 1e-05
  %v1019 = vadd.f32 %v955, 1e-05
  %v1020 = vadd.f32 %v956, 1e-05
  %v1021 = vadd.f32 %v957, 1e-05
  %v1022 = vadd.f32 %v958, 1e-05
  %v1023 = vadd.f32 %v959, 1e-05
  %v1024 = vadd.f32 %v960, 1e-05
  %v1025 = vadd.f32 %v961, 1e-05
  %v1026 = vadd.f32 %v962, 1e-05
  %v1027 = vadd.f32 %v963, 1e-05
  %v1028 = vadd.f32 %v964, 1e-05
  %v1029 = vadd.f32 %v965, 1e-05
  %v1030 = vadd.f32 %v966, 1e-05
  %v1031 = vadd.f32 %v967, 1e-05
  %v1032 = vadd.f32 %v968, 1e-05
  %v1033 = vadd.f32 %v969, 1e-05
  %v1034 = vadd.f32 %v970, 1e-05
  %v1035 = vadd.f32 %v971, 1e-05
  %v1036 = vadd.f32 %v972, 1e-05
  %v1037 = vadd.f32 %v973, 1e-05
  %v1038 = vadd.f32 %v974, 1e-05
  %v1039 = vadd.f32 %v975, 1e-05
  %v1040 = vadd.f32 %v976, 1e-05
  %v1041 = vadd.f32 %v977, 1e-05
  %v1042 = vadd.f32 %v978, 1e-05
  %v1043 = vadd.f32 %v979, 1e-05
  %v1044 = vadd.f32 %v980, 1e-05
  %v1045 = vadd.f32 %v981, 1e-05
  %v1046 = vadd.f32 %v982, 1e-05
  %v1047 = vadd.f32 %v983, 1e-05
  %v1048 = vrsqrt.pop %v1016
  %v1049 = vrsqrt.pop %v1017
  %v1050 = vrsqrt.pop %v1018
  %v1051 = vrsqrt.pop %v1019
  %v1052 = vrsqrt.pop %v1020
  %v1053 = vrsqrt.pop %v1021
  %v1054 = vrsqrt.pop %v1022
  %v1055 = vrsqrt.pop %v1023
  %v1056 = vrsqrt.pop %v1024
  %v1057 = vrsqrt.pop %v1025
  %v1058 = vrsqrt.pop %v1026
  %v1059 = vrsqrt.pop %v1027
  %v1060 = vrsqrt.pop %v1028
  %v1061 = vrsqrt.pop %v1029
  %v1062 = vrsqrt.pop %v1030
  %v1063 = vrsqrt.pop %v1031
  %v1064 = vrsqrt.pop %v1032
  %v1065 = vrsqrt.pop %v1033
  %v1066 = vrsqrt.pop %v1034
  %v1067 = vrsqrt.pop %v1035
  %v1068 = vrsqrt.pop %v1036
  %v1069 = vrsqrt.pop %v1037
  %v1070 = vrsqrt.pop %v1038
  %v1071 = vrsqrt.pop %v1039
  %v1072 = vrsqrt.pop %v1040
  %v1073 = vrsqrt.pop %v1041
  %v1074 = vrsqrt.pop %v1042
  %v1075 = vrsqrt.pop %v1043
  %v1076 = vrsqrt.pop %v1044
  %v1077 = vrsqrt.pop %v1045
  %v1078 = vrsqrt.pop %v1046
  %v1079 = vrsqrt.pop %v1047
  %v1080 = vmul.f32 %v984, %v1048
  %v1081 = vmul.f32 %v985, %v1049
  %v1082 = vmul.f32 %v986, %v1050
  %v1083 = vmul.f32 %v987, %v1051
  %v1084 = vmul.f32 %v988, %v1052
  %v1085 = vmul.f32 %v989, %v1053
  %v1086 = vmul.f32 %v990, %v1054
  %v1087 = vmul.f32 %v991, %v1055
  %v1088 = vmul.f32 %v992, %v1056
  %v1089 = vmul.f32 %v993, %v1057
  %v1090 = vmul.f32 %v994, %v1058
  %v1091 = vmul.f32 %v995, %v1059
  %v1092 = vmul.f32 %v996, %v1060
  %v1093 = vmul.f32 %v997, %v1061
  %v1094 = vmul.f32 %v998, %v1062
  %v1095 = vmul.f32 %v999, %v1063
  %v1096 = vmul.f32 %v1000, %v1064
  %v1097 = vmul.f32 %v1001, %v1065
  %v1098 = vmul.f32 %v1002, %v1066
  %v1099 = vmul.f32 %v1003, %v1067
  %v1100 = vmul.f32 %v1004, %v1068
  %v1101 = vmul.f32 %v1005, %v1069
  %v1102 = vmul.f32 %v1006, %v1070
  %v1103 = vmul.f32 %v1007, %v1071
  %v1104 = vmul.f32 %v1008, %v1072
  %v1105 = vmul.f32 %v1009, %v1073
  %v1106 = vmul.f32 %v1010, %v1074
  %v1107 = vmul.f32 %v1011, %v1075
  %v1108 = vmul.f32 %v1012, %v1076
  %v1109 = vmul.f32 %v1013, %v1077
  %v1110 = vmul.f32 %v1014, %v1078
  %v1111 = vmul.f32 %v1015, %v1079
  %v1112 = vld [vmem:[%s5] sm:$0xff]
  %v1113 = vld [vmem:[%s5 + $0x8] sm:$0xff]
  %v1114 = vld [vmem:[%s5 + $0x10] sm:$0xff]
  %v1115 = vld [vmem:[%s5 + $0x18] sm:$0xff]
  %v1116 = vld [vmem:[%s5 + $0x20] sm:$0xff]
  %v1117 = vld [vmem:[%s5 + $0x28] sm:$0xff]
  %v1118 = vld [vmem:[%s5 + $0x30] sm:$0xff]
  %v1119 = vld [vmem:[%s5 + $0x38] sm:$0xff]
  %v1120 = vld [vmem:[%s5 + $0x40] sm:$0xff]
  %v1121 = vld [vmem:[%s5 + $0x48] sm:$0xff]
  %v1122 = vld [vmem:[%s5 + $0x50] sm:$0xff]
  %v1123 = vld [vmem:[%s5 + $0x58] sm:$0xff]
  %v1124 = vld [vmem:[%s5 + $0x60] sm:$0xff]
  %v1125 = vld [vmem:[%s5 + $0x68] sm:$0xff]
  %v1126 = vld [vmem:[%s5 + $0x70] sm:$0xff]
  %v1127 = vld [vmem:[%s5 + $0x78] sm:$0xff]
  %v1128 = vld [vmem:[%s5 + $0x80] sm:$0xff]
  %v1129 = vld [vmem:[%s5 + $0x88] sm:$0xff]
  %v1130 = vld [vmem:[%s5 + $0x90] sm:$0xff]
  %v1131 = vld [vmem:[%s5 + $0x98] sm:$0xff]
  %v1132 = vld [vmem:[%s5 + $0xa0] sm:$0xff]
  %v1133 = vld [vmem:[%s5 + $0xa8] sm:$0xff]
  %v1134 = vld [vmem:[%s5 + $0xb0] sm:$0xff]
  %v1135 = vld [vmem:[%s5 + $0xb8] sm:$0xff]
  %v1136 = vld [vmem:[%s5 + $0xc0] sm:$0xff]
  %v1137 = vld [vmem:[%s5 + $0xc8] sm:$0xff]
  %v1138 = vld [vmem:[%s5 + $0xd0] sm:$0xff]
  %v1139 = vld [vmem:[%s5 + $0xd8] sm:$0xff]
  %v1140 = vld [vmem:[%s5 + $0xe0] sm:$0xff]
  %v1141 = vld [vmem:[%s5 + $0xe8] sm:$0xff]
  %v1142 = vld [vmem:[%s5 + $0xf0] sm:$0xff]
  %v1143 = vld [vmem:[%s5 + $0xf8] sm:$0xff]
  %v1144 = vmul.f32 %v856, %v1080
  %v1145 = vmul.f32 %v857, %v1081
  %v1146 = vmul.f32 %v858, %v1082
  %v1147 = vmul.f32 %v859, %v1083
  %v1148 = vmul.f32 %v860, %v1084
  %v1149 = vmul.f32 %v861, %v1085
  %v1150 = vmul.f32 %v862, %v1086
  %v1151 = vmul.f32 %v863, %v1087
  %v1152 = vmul.f32 %v864, %v1088
  %v1153 = vmul.f32 %v865, %v1089
  %v1154 = vmul.f32 %v866, %v1090
  %v1155 = vmul.f32 %v867, %v1091
  %v1156 = vmul.f32 %v868, %v1092
  %v1157 = vmul.f32 %v869, %v1093
  %v1158 = vmul.f32 %v870, %v1094
  %v1159 = vmul.f32 %v871, %v1095
  %v1160 = vmul.f32 %v872, %v1096
  %v1161 = vmul.f32 %v873, %v1097
  %v1162 = vmul.f32 %v874, %v1098
  %v1163 = vmul.f32 %v875, %v1099
  %v1164 = vmul.f32 %v876, %v1100
  %v1165 = vmul.f32 %v877, %v1101
  %v1166 = vmul.f32 %v878, %v1102
  %v1167 = vmul.f32 %v879, %v1103
  %v1168 = vmul.f32 %v880, %v1104
  %v1169 = vmul.f32 %v881, %v1105
  %v1170 = vmul.f32 %v882, %v1106
  %v1171 = vmul.f32 %v883, %v1107
  %v1172 = vmul.f32 %v884, %v1108
  %v1173 = vmul.f32 %v885, %v1109
  %v1174 = vmul.f32 %v886, %v1110
  %v1175 = vmul.f32 %v887, %v1111
  %v1176 = vsub.f32 %v1112, %v1144
  %v1177 = vsub.f32 %v1113, %v1145
  %v1178 = vsub.f32 %v1114, %v1146
  %v1179 = vsub.f32 %v1115, %v1147
  %v1180 = vsub.f32 %v1116, %v1148
  %v1181 = vsub.f32 %v1117, %v1149
  %v1182 = vsub.f32 %v1118, %v1150
  %v1183 = vsub.f32 %v1119, %v1151
  %v1184 = vsub.f32 %v1120, %v1152
  %v1185 = vsub.f32 %v1121, %v1153
  %v1186 = vsub.f32 %v1122, %v1154
  %v1187 = vsub.f32 %v1123, %v1155
  %v1188 = vsub.f32 %v1124, %v1156
  %v1189 = vsub.f32 %v1125, %v1157
  %v1190 = vsub.f32 %v1126, %v1158
  %v1191 = vsub.f32 %v1127, %v1159
  %v1192 = vsub.f32 %v1128, %v1160
  %v1193 = vsub.f32 %v1129, %v1161
  %v1194 = vsub.f32 %v1130, %v1162
  %v1195 = vsub.f32 %v1131, %v1163
  %v1196 = vsub.f32 %v1132, %v1164
  %v1197 = vsub.f32 %v1133, %v1165
  %v1198 = vsub.f32 %v1134, %v1166
  %v1199 = vsub.f32 %v1135, %v1167
  %v1200 = vsub.f32 %v1136, %v1168
  %v1201 = vsub.f32 %v1137, %v1169
  %v1202 = vsub.f32 %v1138, %v1170
  %v1203 = vsub.f32 %v1139, %v1171
  %v1204 = vsub.f32 %v1140, %v1172
  %v1205 = vsub.f32 %v1141, %v1173
  %v1206 = vsub.f32 %v1142, %v1174
  %v1207 = vsub.f32 %v1143, %v1175
  %v1208 = vld [vmem:[%s1] sm:$0xff]
  %v1209 = vld [vmem:[%s1 + $0x8] sm:$0xff]
  %v1210 = vld [vmem:[%s1 + $0x10] sm:$0xff]
  %v1211 = vld [vmem:[%s1 + $0x18] sm:$0xff]
  %v1212 = vld [vmem:[%s1 + $0x20] sm:$0xff]
  %v1213 = vld [vmem:[%s1 + $0x28] sm:$0xff]
  %v1214 = vld [vmem:[%s1 + $0x30] sm:$0xff]
  %v1215 = vld [vmem:[%s1 + $0x38] sm:$0xff]
  %v1216 = vld [vmem:[%s1 + $0x40] sm:$0xff]
  %v1217 = vld [vmem:[%s1 + $0x48] sm:$0xff]
  %v1218 = vld [vmem:[%s1 + $0x50] sm:$0xff]
  %v1219 = vld [vmem:[%s1 + $0x58] sm:$0xff]
  %v1220 = vld [vmem:[%s1 + $0x60] sm:$0xff]
  %v1221 = vld [vmem:[%s1 + $0x68] sm:$0xff]
  %v1222 = vld [vmem:[%s1 + $0x70] sm:$0xff]
  %v1223 = vld [vmem:[%s1 + $0x78] sm:$0xff]
  %v1224 = vld [vmem:[%s1 + $0x80] sm:$0xff]
  %v1225 = vld [vmem:[%s1 + $0x88] sm:$0xff]
  %v1226 = vld [vmem:[%s1 + $0x90] sm:$0xff]
  %v1227 = vld [vmem:[%s1 + $0x98] sm:$0xff]
  %v1228 = vld [vmem:[%s1 + $0xa0] sm:$0xff]
  %v1229 = vld [vmem:[%s1 + $0xa8] sm:$0xff]
  %v1230 = vld [vmem:[%s1 + $0xb0] sm:$0xff]
  %v1231 = vld [vmem:[%s1 + $0xb8] sm:$0xff]
  %v1232 = vld [vmem:[%s1 + $0xc0] sm:$0xff]
  %v1233 = vld [vmem:[%s1 + $0xc8] sm:$0xff]
  %v1234 = vld [vmem:[%s1 + $0xd0] sm:$0xff]
  %v1235 = vld [vmem:[%s1 + $0xd8] sm:$0xff]
  %v1236 = vld [vmem:[%s1 + $0xe0] sm:$0xff]
  %v1237 = vld [vmem:[%s1 + $0xe8] sm:$0xff]
  %v1238 = vld [vmem:[%s1 + $0xf0] sm:$0xff]
  %v1239 = vld [vmem:[%s1 + $0xf8] sm:$0xff]
  %v1240 = vunpack.c.l.bf16 %v1208
  %v1241 = vunpack.c.h.bf16 %v1208
  %v1242 = vunpack.c.l.bf16 %v1209
  %v1243 = vunpack.c.h.bf16 %v1209
  %v1244 = vunpack.c.l.bf16 %v1210
  %v1245 = vunpack.c.h.bf16 %v1210
  %v1246 = vunpack.c.l.bf16 %v1211
  %v1247 = vunpack.c.h.bf16 %v1211
  %v1248 = vunpack.c.l.bf16 %v1212
  %v1249 = vunpack.c.h.bf16 %v1212
  %v1250 = vunpack.c.l.bf16 %v1213
  %v1251 = vunpack.c.h.bf16 %v1213
  %v1252 = vunpack.c.l.bf16 %v1214
  %v1253 = vunpack.c.h.bf16 %v1214
  %v1254 = vunpack.c.l.bf16 %v1215
  %v1255 = vunpack.c.h.bf16 %v1215
  %v1256 = vunpack.c.l.bf16 %v1216
  %v1257 = vunpack.c.h.bf16 %v1216
  %v1258 = vunpack.c.l.bf16 %v1217
  %v1259 = vunpack.c.h.bf16 %v1217
  %v1260 = vunpack.c.l.bf16 %v1218
  %v1261 = vunpack.c.h.bf16 %v1218
  %v1262 = vunpack.c.l.bf16 %v1219
  %v1263 = vunpack.c.h.bf16 %v1219
  %v1264 = vunpack.c.l.bf16 %v1220
  %v1265 = vunpack.c.h.bf16 %v1220
  %v1266 = vunpack.c.l.bf16 %v1221
  %v1267 = vunpack.c.h.bf16 %v1221
  %v1268 = vunpack.c.l.bf16 %v1222
  %v1269 = vunpack.c.h.bf16 %v1222
  %v1270 = vunpack.c.l.bf16 %v1223
  %v1271 = vunpack.c.h.bf16 %v1223
  %v1272 = vunpack.c.l.bf16 %v1224
  %v1273 = vunpack.c.h.bf16 %v1224
  %v1274 = vunpack.c.l.bf16 %v1225
  %v1275 = vunpack.c.h.bf16 %v1225
  %v1276 = vunpack.c.l.bf16 %v1226
  %v1277 = vunpack.c.h.bf16 %v1226
  %v1278 = vunpack.c.l.bf16 %v1227
  %v1279 = vunpack.c.h.bf16 %v1227
  %v1280 = vunpack.c.l.bf16 %v1228
  %v1281 = vunpack.c.h.bf16 %v1228
  %v1282 = vunpack.c.l.bf16 %v1229
  %v1283 = vunpack.c.h.bf16 %v1229
  %v1284 = vunpack.c.l.bf16 %v1230
  %v1285 = vunpack.c.h.bf16 %v1230
  %v1286 = vunpack.c.l.bf16 %v1231
  %v1287 = vunpack.c.h.bf16 %v1231
  %v1288 = vunpack.c.l.bf16 %v1232
  %v1289 = vunpack.c.h.bf16 %v1232
  %v1290 = vunpack.c.l.bf16 %v1233
  %v1291 = vunpack.c.h.bf16 %v1233
  %v1292 = vunpack.c.l.bf16 %v1234
  %v1293 = vunpack.c.h.bf16 %v1234
  %v1294 = vunpack.c.l.bf16 %v1235
  %v1295 = vunpack.c.h.bf16 %v1235
  %v1296 = vunpack.c.l.bf16 %v1236
  %v1297 = vunpack.c.h.bf16 %v1236
  %v1298 = vunpack.c.l.bf16 %v1237
  %v1299 = vunpack.c.h.bf16 %v1237
  %v1300 = vunpack.c.l.bf16 %v1238
  %v1301 = vunpack.c.h.bf16 %v1238
  %v1302 = vunpack.c.l.bf16 %v1239
  %v1303 = vunpack.c.h.bf16 %v1239
  %1305 = vset.pattern.permute.xlu0 0
  %1306 = vperm.xlu0 %1305, %v1080
  %v1307 = vpop.permute.xlu0 %1306
  %1310 = vset.pattern.permute.xlu0 0
  %1311 = vperm.xlu0 %1310, %v1081
  %v1312 = vpop.permute.xlu0 %1311
  %1315 = vset.pattern.permute.xlu0 0
  %1316 = vperm.xlu0 %1315, %v1082
  %v1317 = vpop.permute.xlu0 %1316
  %1320 = vset.pattern.permute.xlu0 0
  %1321 = vperm.xlu0 %1320, %v1083
  %v1322 = vpop.permute.xlu0 %1321
  %1325 = vset.pattern.permute.xlu0 0
  %1326 = vperm.xlu0 %1325, %v1084
  %v1327 = vpop.permute.xlu0 %1326
  %1330 = vset.pattern.permute.xlu0 0
  %1331 = vperm.xlu0 %1330, %v1085
  %v1332 = vpop.permute.xlu0 %1331
  %1335 = vset.pattern.permute.xlu0 0
  %1336 = vperm.xlu0 %1335, %v1086
  %v1337 = vpop.permute.xlu0 %1336
  %1340 = vset.pattern.permute.xlu0 0
  %1341 = vperm.xlu0 %1340, %v1087
  %v1342 = vpop.permute.xlu0 %1341
  %1345 = vset.pattern.permute.xlu0 0
  %1346 = vperm.xlu0 %1345, %v1088
  %v1347 = vpop.permute.xlu0 %1346
  %1350 = vset.pattern.permute.xlu0 0
  %1351 = vperm.xlu0 %1350, %v1089
  %v1352 = vpop.permute.xlu0 %1351
  %1355 = vset.pattern.permute.xlu0 0
  %1356 = vperm.xlu0 %1355, %v1090
  %v1357 = vpop.permute.xlu0 %1356
  %1360 = vset.pattern.permute.xlu0 0
  %1361 = vperm.xlu0 %1360, %v1091
  %v1362 = vpop.permute.xlu0 %1361
  %1365 = vset.pattern.permute.xlu0 0
  %1366 = vperm.xlu0 %1365, %v1092
  %v1367 = vpop.permute.xlu0 %1366
  %1370 = vset.pattern.permute.xlu0 0
  %1371 = vperm.xlu0 %1370, %v1093
  %v1372 = vpop.permute.xlu0 %1371
  %1375 = vset.pattern.permute.xlu0 0
  %1376 = vperm.xlu0 %1375, %v1094
  %v1377 = vpop.permute.xlu0 %1376
  %1380 = vset.pattern.permute.xlu0 0
  %1381 = vperm.xlu0 %1380, %v1095
  %v1382 = vpop.permute.xlu0 %1381
  %1385 = vset.pattern.permute.xlu0 0
  %1386 = vperm.xlu0 %1385, %v1096
  %v1387 = vpop.permute.xlu0 %1386
  %1390 = vset.pattern.permute.xlu0 0
  %1391 = vperm.xlu0 %1390, %v1097
  %v1392 = vpop.permute.xlu0 %1391
  %1395 = vset.pattern.permute.xlu0 0
  %1396 = vperm.xlu0 %1395, %v1098
  %v1397 = vpop.permute.xlu0 %1396
  %1400 = vset.pattern.permute.xlu0 0
  %1401 = vperm.xlu0 %1400, %v1099
  %v1402 = vpop.permute.xlu0 %1401
  %1405 = vset.pattern.permute.xlu0 0
  %1406 = vperm.xlu0 %1405, %v1100
  %v1407 = vpop.permute.xlu0 %1406
  %1410 = vset.pattern.permute.xlu0 0
  %1411 = vperm.xlu0 %1410, %v1101
  %v1412 = vpop.permute.xlu0 %1411
  %1415 = vset.pattern.permute.xlu0 0
  %1416 = vperm.xlu0 %1415, %v1102
  %v1417 = vpop.permute.xlu0 %1416
  %1420 = vset.pattern.permute.xlu0 0
  %1421 = vperm.xlu0 %1420, %v1103
  %v1422 = vpop.permute.xlu0 %1421
  %1425 = vset.pattern.permute.xlu0 0
  %1426 = vperm.xlu0 %1425, %v1104
  %v1427 = vpop.permute.xlu0 %1426
  %1430 = vset.pattern.permute.xlu0 0
  %1431 = vperm.xlu0 %1430, %v1105
  %v1432 = vpop.permute.xlu0 %1431
  %1435 = vset.pattern.permute.xlu0 0
  %1436 = vperm.xlu0 %1435, %v1106
  %v1437 = vpop.permute.xlu0 %1436
  %1440 = vset.pattern.permute.xlu0 0
  %1441 = vperm.xlu0 %1440, %v1107
  %v1442 = vpop.permute.xlu0 %1441
  %1445 = vset.pattern.permute.xlu0 0
  %1446 = vperm.xlu0 %1445, %v1108
  %v1447 = vpop.permute.xlu0 %1446
  %1450 = vset.pattern.permute.xlu0 0
  %1451 = vperm.xlu0 %1450, %v1109
  %v1452 = vpop.permute.xlu0 %1451
  %1455 = vset.pattern.permute.xlu0 0
  %1456 = vperm.xlu0 %1455, %v1110
  %v1457 = vpop.permute.xlu0 %1456
  %1460 = vset.pattern.permute.xlu0 0
  %1461 = vperm.xlu0 %1460, %v1111
  %v1462 = vpop.permute.xlu0 %1461
  %v1464 = vmul.f32 %v442, %v1307
  %v1465 = vmul.f32 %v444, %v1307
  %v1466 = vmul.f32 %v446, %v1312
  %v1467 = vmul.f32 %v448, %v1312
  %v1468 = vmul.f32 %v452, %v1317
  %v1469 = vmul.f32 %v454, %v1317
  %v1470 = vmul.f32 %v456, %v1322
  %v1471 = vmul.f32 %v458, %v1322
  %v1472 = vmul.f32 %v462, %v1327
  %v1473 = vmul.f32 %v464, %v1327
  %v1474 = vmul.f32 %v466, %v1332
  %v1475 = vmul.f32 %v468, %v1332
  %v1476 = vmul.f32 %v472, %v1337
  %v1477 = vmul.f32 %v474, %v1337
  %v1478 = vmul.f32 %v476, %v1342
  %v1479 = vmul.f32 %v478, %v1342
  %v1480 = vmul.f32 %v482, %v1347
  %v1481 = vmul.f32 %v484, %v1347
  %v1482 = vmul.f32 %v486, %v1352
  %v1483 = vmul.f32 %v488, %v1352
  %v1484 = vmul.f32 %v492, %v1357
  %v1485 = vmul.f32 %v494, %v1357
  %v1486 = vmul.f32 %v496, %v1362
  %v1487 = vmul.f32 %v498, %v1362
  %v1488 = vmul.f32 %v502, %v1367
  %v1489 = vmul.f32 %v504, %v1367
  %v1490 = vmul.f32 %v506, %v1372
  %v1491 = vmul.f32 %v508, %v1372
  %v1492 = vmul.f32 %v512, %v1377
  %v1493 = vmul.f32 %v514, %v1377
  %v1494 = vmul.f32 %v516, %v1382
  %v1495 = vmul.f32 %v518, %v1382
  %v1496 = vmul.f32 %v522, %v1387
  %v1497 = vmul.f32 %v524, %v1387
  %v1498 = vmul.f32 %v526, %v1392
  %v1499 = vmul.f32 %v528, %v1392
  %v1500 = vmul.f32 %v532, %v1397
  %v1501 = vmul.f32 %v534, %v1397
  %v1502 = vmul.f32 %v536, %v1402
  %v1503 = vmul.f32 %v538, %v1402
  %v1504 = vmul.f32 %v542, %v1407
  %v1505 = vmul.f32 %v544, %v1407
  %v1506 = vmul.f32 %v546, %v1412
  %v1507 = vmul.f32 %v548, %v1412
  %v1508 = vmul.f32 %v552, %v1417
  %v1509 = vmul.f32 %v554, %v1417
  %v1510 = vmul.f32 %v556, %v1422
  %v1511 = vmul.f32 %v558, %v1422
  %v1512 = vmul.f32 %v562, %v1427
  %v1513 = vmul.f32 %v564, %v1427
  %v1514 = vmul.f32 %v566, %v1432
  %v1515 = vmul.f32 %v568, %v1432
  %v1516 = vmul.f32 %v572, %v1437
  %v1517 = vmul.f32 %v574, %v1437
  %v1518 = vmul.f32 %v576, %v1442
  %v1519 = vmul.f32 %v578, %v1442
  %v1520 = vmul.f32 %v582, %v1447
  %v1521 = vmul.f32 %v584, %v1447
  %v1522 = vmul.f32 %v586, %v1452
  %v1523 = vmul.f32 %v588, %v1452
  %v1524 = vmul.f32 %v592, %v1457
  %v1525 = vmul.f32 %v594, %v1457
  %v1526 = vmul.f32 %v596, %v1462
  %v1527 = vmul.f32 %v598, %v1462
  %v1528 = vadd.f32 %v1240, %v1464
  %v1529 = vadd.f32 %v1241, %v1465
  %v1530 = vadd.f32 %v1242, %v1466
  %v1531 = vadd.f32 %v1243, %v1467
  %v1532 = vadd.f32 %v1244, %v1468
  %v1533 = vadd.f32 %v1245, %v1469
  %v1534 = vadd.f32 %v1246, %v1470
  %v1535 = vadd.f32 %v1247, %v1471
  %v1536 = vadd.f32 %v1248, %v1472
  %v1537 = vadd.f32 %v1249, %v1473
  %v1538 = vadd.f32 %v1250, %v1474
  %v1539 = vadd.f32 %v1251, %v1475
  %v1540 = vadd.f32 %v1252, %v1476
  %v1541 = vadd.f32 %v1253, %v1477
  %v1542 = vadd.f32 %v1254, %v1478
  %v1543 = vadd.f32 %v1255, %v1479
  %v1544 = vadd.f32 %v1256, %v1480
  %v1545 = vadd.f32 %v1257, %v1481
  %v1546 = vadd.f32 %v1258, %v1482
  %v1547 = vadd.f32 %v1259, %v1483
  %v1548 = vadd.f32 %v1260, %v1484
  %v1549 = vadd.f32 %v1261, %v1485
  %v1550 = vadd.f32 %v1262, %v1486
  %v1551 = vadd.f32 %v1263, %v1487
  %v1552 = vadd.f32 %v1264, %v1488
  %v1553 = vadd.f32 %v1265, %v1489
  %v1554 = vadd.f32 %v1266, %v1490
  %v1555 = vadd.f32 %v1267, %v1491
  %v1556 = vadd.f32 %v1268, %v1492
  %v1557 = vadd.f32 %v1269, %v1493
  %v1558 = vadd.f32 %v1270, %v1494
  %v1559 = vadd.f32 %v1271, %v1495
  %v1560 = vadd.f32 %v1272, %v1496
  %v1561 = vadd.f32 %v1273, %v1497
  %v1562 = vadd.f32 %v1274, %v1498
  %v1563 = vadd.f32 %v1275, %v1499
  %v1564 = vadd.f32 %v1276, %v1500
  %v1565 = vadd.f32 %v1277, %v1501
  %v1566 = vadd.f32 %v1278, %v1502
  %v1567 = vadd.f32 %v1279, %v1503
  %v1568 = vadd.f32 %v1280, %v1504
  %v1569 = vadd.f32 %v1281, %v1505
  %v1570 = vadd.f32 %v1282, %v1506
  %v1571 = vadd.f32 %v1283, %v1507
  %v1572 = vadd.f32 %v1284, %v1508
  %v1573 = vadd.f32 %v1285, %v1509
  %v1574 = vadd.f32 %v1286, %v1510
  %v1575 = vadd.f32 %v1287, %v1511
  %v1576 = vadd.f32 %v1288, %v1512
  %v1577 = vadd.f32 %v1289, %v1513
  %v1578 = vadd.f32 %v1290, %v1514
  %v1579 = vadd.f32 %v1291, %v1515
  %v1580 = vadd.f32 %v1292, %v1516
  %v1581 = vadd.f32 %v1293, %v1517
  %v1582 = vadd.f32 %v1294, %v1518
  %v1583 = vadd.f32 %v1295, %v1519
  %v1584 = vadd.f32 %v1296, %v1520
  %v1585 = vadd.f32 %v1297, %v1521
  %v1586 = vadd.f32 %v1298, %v1522
  %v1587 = vadd.f32 %v1299, %v1523
  %v1588 = vadd.f32 %v1300, %v1524
  %v1589 = vadd.f32 %v1301, %v1525
  %v1590 = vadd.f32 %v1302, %v1526
  %v1591 = vadd.f32 %v1303, %v1527
  %1593 = vset.pattern.permute.xlu0 0
  %1594 = vperm.xlu0 %1593, %v1176
  %v1595 = vpop.permute.xlu0 %1594
  %1598 = vset.pattern.permute.xlu0 0
  %1599 = vperm.xlu0 %1598, %v1177
  %v1600 = vpop.permute.xlu0 %1599
  %1603 = vset.pattern.permute.xlu0 0
  %1604 = vperm.xlu0 %1603, %v1178
  %v1605 = vpop.permute.xlu0 %1604
  %1608 = vset.pattern.permute.xlu0 0
  %1609 = vperm.xlu0 %1608, %v1179
  %v1610 = vpop.permute.xlu0 %1609
  %1613 = vset.pattern.permute.xlu0 0
  %1614 = vperm.xlu0 %1613, %v1180
  %v1615 = vpop.permute.xlu0 %1614
  %1618 = vset.pattern.permute.xlu0 0
  %1619 = vperm.xlu0 %1618, %v1181
  %v1620 = vpop.permute.xlu0 %1619
  %1623 = vset.pattern.permute.xlu0 0
  %1624 = vperm.xlu0 %1623, %v1182
  %v1625 = vpop.permute.xlu0 %1624
  %1628 = vset.pattern.permute.xlu0 0
  %1629 = vperm.xlu0 %1628, %v1183
  %v1630 = vpop.permute.xlu0 %1629
  %1633 = vset.pattern.permute.xlu0 0
  %1634 = vperm.xlu0 %1633, %v1184
  %v1635 = vpop.permute.xlu0 %1634
  %1638 = vset.pattern.permute.xlu0 0
  %1639 = vperm.xlu0 %1638, %v1185
  %v1640 = vpop.permute.xlu0 %1639
  %1643 = vset.pattern.permute.xlu0 0
  %1644 = vperm.xlu0 %1643, %v1186
  %v1645 = vpop.permute.xlu0 %1644
  %1648 = vset.pattern.permute.xlu0 0
  %1649 = vperm.xlu0 %1648, %v1187
  %v1650 = vpop.permute.xlu0 %1649
  %1653 = vset.pattern.permute.xlu0 0
  %1654 = vperm.xlu0 %1653, %v1188
  %v1655 = vpop.permute.xlu0 %1654
  %1658 = vset.pattern.permute.xlu0 0
  %1659 = vperm.xlu0 %1658, %v1189
  %v1660 = vpop.permute.xlu0 %1659
  %1663 = vset.pattern.permute.xlu0 0
  %1664 = vperm.xlu0 %1663, %v1190
  %v1665 = vpop.permute.xlu0 %1664
  %1668 = vset.pattern.permute.xlu0 0
  %1669 = vperm.xlu0 %1668, %v1191
  %v1670 = vpop.permute.xlu0 %1669
  %1673 = vset.pattern.permute.xlu0 0
  %1674 = vperm.xlu0 %1673, %v1192
  %v1675 = vpop.permute.xlu0 %1674
  %1678 = vset.pattern.permute.xlu0 0
  %1679 = vperm.xlu0 %1678, %v1193
  %v1680 = vpop.permute.xlu0 %1679
  %1683 = vset.pattern.permute.xlu0 0
  %1684 = vperm.xlu0 %1683, %v1194
  %v1685 = vpop.permute.xlu0 %1684
  %1688 = vset.pattern.permute.xlu0 0
  %1689 = vperm.xlu0 %1688, %v1195
  %v1690 = vpop.permute.xlu0 %1689
  %1693 = vset.pattern.permute.xlu0 0
  %1694 = vperm.xlu0 %1693, %v1196
  %v1695 = vpop.permute.xlu0 %1694
  %1698 = vset.pattern.permute.xlu0 0
  %1699 = vperm.xlu0 %1698, %v1197
  %v1700 = vpop.permute.xlu0 %1699
  %1703 = vset.pattern.permute.xlu0 0
  %1704 = vperm.xlu0 %1703, %v1198
  %v1705 = vpop.permute.xlu0 %1704
  %1708 = vset.pattern.permute.xlu0 0
  %1709 = vperm.xlu0 %1708, %v1199
  %v1710 = vpop.permute.xlu0 %1709
  %1713 = vset.pattern.permute.xlu0 0
  %1714 = vperm.xlu0 %1713, %v1200
  %v1715 = vpop.permute.xlu0 %1714
  %1718 = vset.pattern.permute.xlu0 0
  %1719 = vperm.xlu0 %1718, %v1201
  %v1720 = vpop.permute.xlu0 %1719
  %1723 = vset.pattern.permute.xlu0 0
  %1724 = vperm.xlu0 %1723, %v1202
  %v1725 = vpop.permute.xlu0 %1724
  %1728 = vset.pattern.permute.xlu0 0
  %1729 = vperm.xlu0 %1728, %v1203
  %v1730 = vpop.permute.xlu0 %1729
  %1733 = vset.pattern.permute.xlu0 0
  %1734 = vperm.xlu0 %1733, %v1204
  %v1735 = vpop.permute.xlu0 %1734
  %1738 = vset.pattern.permute.xlu0 0
  %1739 = vperm.xlu0 %1738, %v1205
  %v1740 = vpop.permute.xlu0 %1739
  %1743 = vset.pattern.permute.xlu0 0
  %1744 = vperm.xlu0 %1743, %v1206
  %v1745 = vpop.permute.xlu0 %1744
  %1748 = vset.pattern.permute.xlu0 0
  %1749 = vperm.xlu0 %1748, %v1207
  %v1750 = vpop.permute.xlu0 %1749
  %v1752 = vadd.f32 %v1528, %v1595
  %v1753 = vadd.f32 %v1529, %v1595
  %v1754 = vadd.f32 %v1530, %v1600
  %v1755 = vadd.f32 %v1531, %v1600
  %v1756 = vadd.f32 %v1532, %v1605
  %v1757 = vadd.f32 %v1533, %v1605
  %v1758 = vadd.f32 %v1534, %v1610
  %v1759 = vadd.f32 %v1535, %v1610
  %v1760 = vadd.f32 %v1536, %v1615
  %v1761 = vadd.f32 %v1537, %v1615
  %v1762 = vadd.f32 %v1538, %v1620
  %v1763 = vadd.f32 %v1539, %v1620
  %v1764 = vadd.f32 %v1540, %v1625
  %v1765 = vadd.f32 %v1541, %v1625
  %v1766 = vadd.f32 %v1542, %v1630
  %v1767 = vadd.f32 %v1543, %v1630
  %v1768 = vadd.f32 %v1544, %v1635
  %v1769 = vadd.f32 %v1545, %v1635
  %v1770 = vadd.f32 %v1546, %v1640
  %v1771 = vadd.f32 %v1547, %v1640
  %v1772 = vadd.f32 %v1548, %v1645
  %v1773 = vadd.f32 %v1549, %v1645
  %v1774 = vadd.f32 %v1550, %v1650
  %v1775 = vadd.f32 %v1551, %v1650
  %v1776 = vadd.f32 %v1552, %v1655
  %v1777 = vadd.f32 %v1553, %v1655
  %v1778 = vadd.f32 %v1554, %v1660
  %v1779 = vadd.f32 %v1555, %v1660
  %v1780 = vadd.f32 %v1556, %v1665
  %v1781 = vadd.f32 %v1557, %v1665
  %v1782 = vadd.f32 %v1558, %v1670
  %v1783 = vadd.f32 %v1559, %v1670
  %v1784 = vadd.f32 %v1560, %v1675
  %v1785 = vadd.f32 %v1561, %v1675
  %v1786 = vadd.f32 %v1562, %v1680
  %v1787 = vadd.f32 %v1563, %v1680
  %v1788 = vadd.f32 %v1564, %v1685
  %v1789 = vadd.f32 %v1565, %v1685
  %v1790 = vadd.f32 %v1566, %v1690
  %v1791 = vadd.f32 %v1567, %v1690
  %v1792 = vadd.f32 %v1568, %v1695
  %v1793 = vadd.f32 %v1569, %v1695
  %v1794 = vadd.f32 %v1570, %v1700
  %v1795 = vadd.f32 %v1571, %v1700
  %v1796 = vadd.f32 %v1572, %v1705
  %v1797 = vadd.f32 %v1573, %v1705
  %v1798 = vadd.f32 %v1574, %v1710
  %v1799 = vadd.f32 %v1575, %v1710
  %v1800 = vadd.f32 %v1576, %v1715
  %v1801 = vadd.f32 %v1577, %v1715
  %v1802 = vadd.f32 %v1578, %v1720
  %v1803 = vadd.f32 %v1579, %v1720
  %v1804 = vadd.f32 %v1580, %v1725
  %v1805 = vadd.f32 %v1581, %v1725
  %v1806 = vadd.f32 %v1582, %v1730
  %v1807 = vadd.f32 %v1583, %v1730
  %v1808 = vadd.f32 %v1584, %v1735
  %v1809 = vadd.f32 %v1585, %v1735
  %v1810 = vadd.f32 %v1586, %v1740
  %v1811 = vadd.f32 %v1587, %v1740
  %v1812 = vadd.f32 %v1588, %v1745
  %v1813 = vadd.f32 %v1589, %v1745
  %v1814 = vadd.f32 %v1590, %v1750
  %v1815 = vadd.f32 %v1591, %v1750
  %v1816 = vmax.f32 %v1752, 0.0
  %v1817 = vmax.f32 %v1753, 0.0
  %v1818 = vmax.f32 %v1754, 0.0
  %v1819 = vmax.f32 %v1755, 0.0
  %v1820 = vmax.f32 %v1756, 0.0
  %v1821 = vmax.f32 %v1757, 0.0
  %v1822 = vmax.f32 %v1758, 0.0
  %v1823 = vmax.f32 %v1759, 0.0
  %v1824 = vmax.f32 %v1760, 0.0
  %v1825 = vmax.f32 %v1761, 0.0
  %v1826 = vmax.f32 %v1762, 0.0
  %v1827 = vmax.f32 %v1763, 0.0
  %v1828 = vmax.f32 %v1764, 0.0
  %v1829 = vmax.f32 %v1765, 0.0
  %v1830 = vmax.f32 %v1766, 0.0
  %v1831 = vmax.f32 %v1767, 0.0
  %v1832 = vmax.f32 %v1768, 0.0
  %v1833 = vmax.f32 %v1769, 0.0
  %v1834 = vmax.f32 %v1770, 0.0
  %v1835 = vmax.f32 %v1771, 0.0
  %v1836 = vmax.f32 %v1772, 0.0
  %v1837 = vmax.f32 %v1773, 0.0
  %v1838 = vmax.f32 %v1774, 0.0
  %v1839 = vmax.f32 %v1775, 0.0
  %v1840 = vmax.f32 %v1776, 0.0
  %v1841 = vmax.f32 %v1777, 0.0
  %v1842 = vmax.f32 %v1778, 0.0
  %v1843 = vmax.f32 %v1779, 0.0
  %v1844 = vmax.f32 %v1780, 0.0
  %v1845 = vmax.f32 %v1781, 0.0
  %v1846 = vmax.f32 %v1782, 0.0
  %v1847 = vmax.f32 %v1783, 0.0
  %v1848 = vmax.f32 %v1784, 0.0
  %v1849 = vmax.f32 %v1785, 0.0
  %v1850 = vmax.f32 %v1786, 0.0
  %v1851 = vmax.f32 %v1787, 0.0
  %v1852 = vmax.f32 %v1788, 0.0
  %v1853 = vmax.f32 %v1789, 0.0
  %v1854 = vmax.f32 %v1790, 0.0
  %v1855 = vmax.f32 %v1791, 0.0
  %v1856 = vmax.f32 %v1792, 0.0
  %v1857 = vmax.f32 %v1793, 0.0
  %v1858 = vmax.f32 %v1794, 0.0
  %v1859 = vmax.f32 %v1795, 0.0
  %v1860 = vmax.f32 %v1796, 0.0
  %v1861 = vmax.f32 %v1797, 0.0
  %v1862 = vmax.f32 %v1798, 0.0
  %v1863 = vmax.f32 %v1799, 0.0
  %v1864 = vmax.f32 %v1800, 0.0
  %v1865 = vmax.f32 %v1801, 0.0
  %v1866 = vmax.f32 %v1802, 0.0
  %v1867 = vmax.f32 %v1803, 0.0
  %v1868 = vmax.f32 %v1804, 0.0
  %v1869 = vmax.f32 %v1805, 0.0
  %v1870 = vmax.f32 %v1806, 0.0
  %v1871 = vmax.f32 %v1807, 0.0
  %v1872 = vmax.f32 %v1808, 0.0
  %v1873 = vmax.f32 %v1809, 0.0
  %v1874 = vmax.f32 %v1810, 0.0
  %v1875 = vmax.f32 %v1811, 0.0
  %v1876 = vmax.f32 %v1812, 0.0
  %v1877 = vmax.f32 %v1813, 0.0
  %v1878 = vmax.f32 %v1814, 0.0
  %v1879 = vmax.f32 %v1815, 0.0
  %v1880 = vld [vmem:[%s3] sm:$0xff]
  %v1881 = vld [vmem:[%s3 + $0x8] sm:$0xff]
  %v1882 = vld [vmem:[%s3 + $0x10] sm:$0xff]
  %v1883 = vld [vmem:[%s3 + $0x18] sm:$0xff]
  %v1884 = vld [vmem:[%s3 + $0x20] sm:$0xff]
  %v1885 = vld [vmem:[%s3 + $0x28] sm:$0xff]
  %v1886 = vld [vmem:[%s3 + $0x30] sm:$0xff]
  %v1887 = vld [vmem:[%s3 + $0x38] sm:$0xff]
  %v1888 = vld [vmem:[%s3 + $0x40] sm:$0xff]
  %v1889 = vld [vmem:[%s3 + $0x48] sm:$0xff]
  %v1890 = vld [vmem:[%s3 + $0x50] sm:$0xff]
  %v1891 = vld [vmem:[%s3 + $0x58] sm:$0xff]
  %v1892 = vld [vmem:[%s3 + $0x60] sm:$0xff]
  %v1893 = vld [vmem:[%s3 + $0x68] sm:$0xff]
  %v1894 = vld [vmem:[%s3 + $0x70] sm:$0xff]
  %v1895 = vld [vmem:[%s3 + $0x78] sm:$0xff]
  %v1896 = vld [vmem:[%s3 + $0x80] sm:$0xff]
  %v1897 = vld [vmem:[%s3 + $0x88] sm:$0xff]
  %v1898 = vld [vmem:[%s3 + $0x90] sm:$0xff]
  %v1899 = vld [vmem:[%s3 + $0x98] sm:$0xff]
  %v1900 = vld [vmem:[%s3 + $0xa0] sm:$0xff]
  %v1901 = vld [vmem:[%s3 + $0xa8] sm:$0xff]
  %v1902 = vld [vmem:[%s3 + $0xb0] sm:$0xff]
  %v1903 = vld [vmem:[%s3 + $0xb8] sm:$0xff]
  %v1904 = vld [vmem:[%s3 + $0xc0] sm:$0xff]
  %v1905 = vld [vmem:[%s3 + $0xc8] sm:$0xff]
  %v1906 = vld [vmem:[%s3 + $0xd0] sm:$0xff]
  %v1907 = vld [vmem:[%s3 + $0xd8] sm:$0xff]
  %v1908 = vld [vmem:[%s3 + $0xe0] sm:$0xff]
  %v1909 = vld [vmem:[%s3 + $0xe8] sm:$0xff]
  %v1910 = vld [vmem:[%s3 + $0xf0] sm:$0xff]
  %v1911 = vld [vmem:[%s3 + $0xf8] sm:$0xff]
  %v1912 = vpack.c.bf16 %v1818, %v1816
  %v1913 = vpack.c.bf16 %v1819, %v1817
  %v1914 = vpack.c.bf16 %v1822, %v1820
  %v1915 = vpack.c.bf16 %v1823, %v1821
  %v1916 = vpack.c.bf16 %v1826, %v1824
  %v1917 = vpack.c.bf16 %v1827, %v1825
  %v1918 = vpack.c.bf16 %v1830, %v1828
  %v1919 = vpack.c.bf16 %v1831, %v1829
  %v1920 = vpack.c.bf16 %v1834, %v1832
  %v1921 = vpack.c.bf16 %v1835, %v1833
  %v1922 = vpack.c.bf16 %v1838, %v1836
  %v1923 = vpack.c.bf16 %v1839, %v1837
  %v1924 = vpack.c.bf16 %v1842, %v1840
  %v1925 = vpack.c.bf16 %v1843, %v1841
  %v1926 = vpack.c.bf16 %v1846, %v1844
  %v1927 = vpack.c.bf16 %v1847, %v1845
  %v1928 = vpack.c.bf16 %v1850, %v1848
  %v1929 = vpack.c.bf16 %v1851, %v1849
  %v1930 = vpack.c.bf16 %v1854, %v1852
  %v1931 = vpack.c.bf16 %v1855, %v1853
  %v1932 = vpack.c.bf16 %v1858, %v1856
  %v1933 = vpack.c.bf16 %v1859, %v1857
  %v1934 = vpack.c.bf16 %v1862, %v1860
  %v1935 = vpack.c.bf16 %v1863, %v1861
  %v1936 = vpack.c.bf16 %v1866, %v1864
  %v1937 = vpack.c.bf16 %v1867, %v1865
  %v1938 = vpack.c.bf16 %v1870, %v1868
  %v1939 = vpack.c.bf16 %v1871, %v1869
  %v1940 = vpack.c.bf16 %v1874, %v1872
  %v1941 = vpack.c.bf16 %v1875, %v1873
  %v1942 = vpack.c.bf16 %v1878, %v1876
  %v1943 = vpack.c.bf16 %v1879, %v1877
  %v1976 = vunpack.c.l.b16 %v1880
  %v1977 = vunpack.c.h.b16 %v1880
  %v1978 = vunpack.c.l.b16 %v1881
  %v1979 = vunpack.c.h.b16 %v1881
  %v1980 = vunpack.c.l.b16 %v1882
  %v1981 = vunpack.c.h.b16 %v1882
  %v1982 = vunpack.c.l.b16 %v1883
  %v1983 = vunpack.c.h.b16 %v1883
  %v1984 = vunpack.c.l.b16 %v1884
  %v1985 = vunpack.c.h.b16 %v1884
  %v1986 = vunpack.c.l.b16 %v1885
  %v1987 = vunpack.c.h.b16 %v1885
  %v1988 = vunpack.c.l.b16 %v1886
  %v1989 = vunpack.c.h.b16 %v1886
  %v1990 = vunpack.c.l.b16 %v1887
  %v1991 = vunpack.c.h.b16 %v1887
  %v1992 = vunpack.c.l.b16 %v1888
  %v1993 = vunpack.c.h.b16 %v1888
  %v1994 = vunpack.c.l.b16 %v1889
  %v1995 = vunpack.c.h.b16 %v1889
  %v1996 = vunpack.c.l.b16 %v1890
  %v1997 = vunpack.c.h.b16 %v1890
  %v1998 = vunpack.c.l.b16 %v1891
  %v1999 = vunpack.c.h.b16 %v1891
  %v2000 = vunpack.c.l.b16 %v1892
  %v2001 = vunpack.c.h.b16 %v1892
  %v2002 = vunpack.c.l.b16 %v1893
  %v2003 = vunpack.c.h.b16 %v1893
  %v2004 = vunpack.c.l.b16 %v1894
  %v2005 = vunpack.c.h.b16 %v1894
  %v2006 = vunpack.c.l.b16 %v1895
  %v2007 = vunpack.c.h.b16 %v1895
  %v2008 = vunpack.c.l.b16 %v1896
  %v2009 = vunpack.c.h.b16 %v1896
  %v2010 = vunpack.c.l.b16 %v1897
  %v2011 = vunpack.c.h.b16 %v1897
  %v2012 = vunpack.c.l.b16 %v1898
  %v2013 = vunpack.c.h.b16 %v1898
  %v2014 = vunpack.c.l.b16 %v1899
  %v2015 = vunpack.c.h.b16 %v1899
  %v2016 = vunpack.c.l.b16 %v1900
  %v2017 = vunpack.c.h.b16 %v1900
  %v2018 = vunpack.c.l.b16 %v1901
  %v2019 = vunpack.c.h.b16 %v1901
  %v2020 = vunpack.c.l.b16 %v1902
  %v2021 = vunpack.c.h.b16 %v1902
  %v2022 = vunpack.c.l.b16 %v1903
  %v2023 = vunpack.c.h.b16 %v1903
  %v2024 = vunpack.c.l.b16 %v1904
  %v2025 = vunpack.c.h.b16 %v1904
  %v2026 = vunpack.c.l.b16 %v1905
  %v2027 = vunpack.c.h.b16 %v1905
  %v2028 = vunpack.c.l.b16 %v1906
  %v2029 = vunpack.c.h.b16 %v1906
  %v2030 = vunpack.c.l.b16 %v1907
  %v2031 = vunpack.c.h.b16 %v1907
  %v2032 = vunpack.c.l.b16 %v1908
  %v2033 = vunpack.c.h.b16 %v1908
  %v2034 = vunpack.c.l.b16 %v1909
  %v2035 = vunpack.c.h.b16 %v1909
  %v2036 = vunpack.c.l.b16 %v1910
  %v2037 = vunpack.c.h.b16 %v1910
  %v2038 = vunpack.c.l.b16 %v1911
  %v2039 = vunpack.c.h.b16 %v1911
  %v2040 = vpack.c.b16 %v1978, %v1976
  %v2041 = vpack.c.b16 %v1979, %v1977
  %v2042 = vpack.c.b16 %v1982, %v1980
  %v2043 = vpack.c.b16 %v1983, %v1981
  %v2044 = vpack.c.b16 %v1986, %v1984
  %v2045 = vpack.c.b16 %v1987, %v1985
  %v2046 = vpack.c.b16 %v1990, %v1988
  %v2047 = vpack.c.b16 %v1991, %v1989
  %v2048 = vpack.c.b16 %v1994, %v1992
  %v2049 = vpack.c.b16 %v1995, %v1993
  %v2050 = vpack.c.b16 %v1998, %v1996
  %v2051 = vpack.c.b16 %v1999, %v1997
  %v2052 = vpack.c.b16 %v2002, %v2000
  %v2053 = vpack.c.b16 %v2003, %v2001
  %v2054 = vpack.c.b16 %v2006, %v2004
  %v2055 = vpack.c.b16 %v2007, %v2005
  %v2056 = vpack.c.b16 %v2010, %v2008
  %v2057 = vpack.c.b16 %v2011, %v2009
  %v2058 = vpack.c.b16 %v2014, %v2012
  %v2059 = vpack.c.b16 %v2015, %v2013
  %v2060 = vpack.c.b16 %v2018, %v2016
  %v2061 = vpack.c.b16 %v2019, %v2017
  %v2062 = vpack.c.b16 %v2022, %v2020
  %v2063 = vpack.c.b16 %v2023, %v2021
  %v2064 = vpack.c.b16 %v2026, %v2024
  %v2065 = vpack.c.b16 %v2027, %v2025
  %v2066 = vpack.c.b16 %v2030, %v2028
  %v2067 = vpack.c.b16 %v2031, %v2029
  %v2068 = vpack.c.b16 %v2034, %v2032
  %v2069 = vpack.c.b16 %v2035, %v2033
  %v2070 = vpack.c.b16 %v2038, %v2036
  %v2071 = vpack.c.b16 %v2039, %v2037
  %2104 = vmatprep.subr.bf16.mxu0 %v1913
  %2105 = vmatpush1.bf16.msra.mxu0 %v1912
  %2106 = vmatprep.subr.bf16.mxu0 %v1915
  %2107 = vmatpush1.bf16.msra.mxu0 %v1914
  %2108 = vmatprep.subr.bf16.mxu0 %v1917
  %2109 = vmatpush1.bf16.msra.mxu0 %v1916
  %2110 = vmatprep.subr.bf16.mxu0 %v1919
  %2111 = vmatpush1.bf16.msra.mxu0 %v1918
  %2112 = vmatprep.subr.bf16.mxu0 %v1921
  %2113 = vmatpush1.bf16.msra.mxu0 %v1920
  %2114 = vmatprep.subr.bf16.mxu0 %v1923
  %2115 = vmatpush1.bf16.msra.mxu0 %v1922
  %2116 = vmatprep.subr.bf16.mxu0 %v1925
  %2117 = vmatpush1.bf16.msra.mxu0 %v1924
  %2118 = vmatprep.subr.bf16.mxu0 %v1927
  %2119 = vmatpush1.bf16.msra.mxu0 %v1926
  %2120 = vmatprep.subr.bf16.mxu0 %v1929
  %2121 = vmatpush1.bf16.msra.mxu0 %v1928
  %2122 = vmatprep.subr.bf16.mxu0 %v1931
  %2123 = vmatpush1.bf16.msra.mxu0 %v1930
  %2124 = vmatprep.subr.bf16.mxu0 %v1933
  %2125 = vmatpush1.bf16.msra.mxu0 %v1932
  %2126 = vmatprep.subr.bf16.mxu0 %v1935
  %2127 = vmatpush1.bf16.msra.mxu0 %v1934
  %2128 = vmatprep.subr.bf16.mxu0 %v1937
  %2129 = vmatpush1.bf16.msra.mxu0 %v1936
  %2130 = vmatprep.subr.bf16.mxu0 %v1939
  %2131 = vmatpush1.bf16.msra.mxu0 %v1938
  %2132 = vmatprep.subr.bf16.mxu0 %v1941
  %2133 = vmatpush1.bf16.msra.mxu0 %v1940
  %2134 = vmatprep.subr.bf16.mxu0 %v1943
  %2135 = vmatpush1.bf16.msra.mxu0 %v1942
  %2136 = vmatprep.mubr.bf16.mxu0 %v2041
  %2137 = vmatmul.mubr.bf16.gmra.mrb[0].mxu0 %v2040
  %v2138 = vpop.f32.mrb[0].mxu0
  %v2139 = vadd.f32 0.0, %v2138
  %v2140 = vpop.f32.mrb[0].mxu0
  %v2141 = vadd.f32 0.0, %v2140
  %v2142 = vpop.f32.mrb[0].mxu0
  %v2143 = vadd.f32 0.0, %v2142
  %v2144 = vpop.f32.mrb[0].mxu0
  %v2145 = vadd.f32 0.0, %v2144
  %2146 = vmatprep.mubr.bf16.mxu0 %v2043
  %2147 = vmatmul.mubr.bf16.gmra.mrb[0].mxu0 %v2042
  %v2148 = vpop.f32.mrb[0].mxu0
  %v2149 = vadd.f32 0.0, %v2148
  %v2150 = vpop.f32.mrb[0].mxu0
  %v2151 = vadd.f32 0.0, %v2150
  %v2152 = vpop.f32.mrb[0].mxu0
  %v2153 = vadd.f32 0.0, %v2152
  %v2154 = vpop.f32.mrb[0].mxu0
  %v2155 = vadd.f32 0.0, %v2154
  %2156 = vmatprep.mubr.bf16.mxu0 %v2045
  %2157 = vmatmul.mubr.bf16.gmra.mrb[0].mxu0 %v2044
  %v2158 = vpop.f32.mrb[0].mxu0
  %v2159 = vadd.f32 0.0, %v2158
  %v2160 = vpop.f32.mrb[0].mxu0
  %v2161 = vadd.f32 0.0, %v2160
  %v2162 = vpop.f32.mrb[0].mxu0
  %v2163 = vadd.f32 0.0, %v2162
  %v2164 = vpop.f32.mrb[0].mxu0
  %v2165 = vadd.f32 0.0, %v2164
  %2166 = vmatprep.mubr.bf16.mxu0 %v2047
  %2167 = vmatmul.mubr.bf16.gmra.mrb[0].mxu0 %v2046
  %v2168 = vpop.f32.mrb[0].mxu0
  %v2169 = vadd.f32 0.0, %v2168
  %v2170 = vpop.f32.mrb[0].mxu0
  %v2171 = vadd.f32 0.0, %v2170
  %v2172 = vpop.f32.mrb[0].mxu0
  %v2173 = vadd.f32 0.0, %v2172
  %v2174 = vpop.f32.mrb[0].mxu0
  %v2175 = vadd.f32 0.0, %v2174
  %2176 = vmatprep.mubr.bf16.mxu0 %v2049
  %2177 = vmatmul.mubr.bf16.gmra.mrb[0].mxu0 %v2048
  %v2178 = vpop.f32.mrb[0].mxu0
  %v2179 = vadd.f32 0.0, %v2178
  %v2180 = vpop.f32.mrb[0].mxu0
  %v2181 = vadd.f32 0.0, %v2180
  %v2182 = vpop.f32.mrb[0].mxu0
  %v2183 = vadd.f32 0.0, %v2182
  %v2184 = vpop.f32.mrb[0].mxu0
  %v2185 = vadd.f32 0.0, %v2184
  %2186 = vmatprep.mubr.bf16.mxu0 %v2051
  %2187 = vmatmul.mubr.bf16.gmra.mrb[0].mxu0 %v2050
  %v2188 = vpop.f32.mrb[0].mxu0
  %v2189 = vadd.f32 0.0, %v2188
  %v2190 = vpop.f32.mrb[0].mxu0
  %v2191 = vadd.f32 0.0, %v2190
  %v2192 = vpop.f32.mrb[0].mxu0
  %v2193 = vadd.f32 0.0, %v2192
  %v2194 = vpop.f32.mrb[0].mxu0
  %v2195 = vadd.f32 0.0, %v2194
  %2196 = vmatprep.mubr.bf16.mxu0 %v2053
  %2197 = vmatmul.mubr.bf16.gmra.mrb[0].mxu0 %v2052
  %v2198 = vpop.f32.mrb[0].mxu0
  %v2199 = vadd.f32 0.0, %v2198
  %v2200 = vpop.f32.mrb[0].mxu0
  %v2201 = vadd.f32 0.0, %v2200
  %v2202 = vpop.f32.mrb[0].mxu0
  %v2203 = vadd.f32 0.0, %v2202
  %v2204 = vpop.f32.mrb[0].mxu0
  %v2205 = vadd.f32 0.0, %v2204
  %2206 = vmatprep.mubr.bf16.mxu0 %v2055
  %2207 = vmatmul.mubr.bf16.gmra.mrb[0].mxu0 %v2054
  %v2208 = vpop.f32.mrb[0].mxu0
  %v2209 = vadd.f32 0.0, %v2208
  %v2210 = vpop.f32.mrb[0].mxu0
  %v2211 = vadd.f32 0.0, %v2210
  %v2212 = vpop.f32.mrb[0].mxu0
  %v2213 = vadd.f32 0.0, %v2212
  %v2214 = vpop.f32.mrb[0].mxu0
  %v2215 = vadd.f32 0.0, %v2214
  %2216 = vmatprep.mubr.bf16.mxu0 %v2057
  %2217 = vmatmul.mubr.bf16.gmra.mrb[0].mxu0 %v2056
  %v2218 = vpop.f32.mrb[0].mxu0
  %v2219 = vadd.f32 0.0, %v2218
  %v2220 = vpop.f32.mrb[0].mxu0
  %v2221 = vadd.f32 0.0, %v2220
  %v2222 = vpop.f32.mrb[0].mxu0
  %v2223 = vadd.f32 0.0, %v2222
  %v2224 = vpop.f32.mrb[0].mxu0
  %v2225 = vadd.f32 0.0, %v2224
  %2226 = vmatprep.mubr.bf16.mxu0 %v2059
  %2227 = vmatmul.mubr.bf16.gmra.mrb[0].mxu0 %v2058
  %v2228 = vpop.f32.mrb[0].mxu0
  %v2229 = vadd.f32 0.0, %v2228
  %v2230 = vpop.f32.mrb[0].mxu0
  %v2231 = vadd.f32 0.0, %v2230
  %v2232 = vpop.f32.mrb[0].mxu0
  %v2233 = vadd.f32 0.0, %v2232
  %v2234 = vpop.f32.mrb[0].mxu0
  %v2235 = vadd.f32 0.0, %v2234
  %2236 = vmatprep.mubr.bf16.mxu0 %v2061
  %2237 = vmatmul.mubr.bf16.gmra.mrb[0].mxu0 %v2060
  %v2238 = vpop.f32.mrb[0].mxu0
  %v2239 = vadd.f32 0.0, %v2238
  %v2240 = vpop.f32.mrb[0].mxu0
  %v2241 = vadd.f32 0.0, %v2240
  %v2242 = vpop.f32.mrb[0].mxu0
  %v2243 = vadd.f32 0.0, %v2242
  %v2244 = vpop.f32.mrb[0].mxu0
  %v2245 = vadd.f32 0.0, %v2244
  %2246 = vmatprep.mubr.bf16.mxu0 %v2063
  %2247 = vmatmul.mubr.bf16.gmra.mrb[0].mxu0 %v2062
  %v2248 = vpop.f32.mrb[0].mxu0
  %v2249 = vadd.f32 0.0, %v2248
  %v2250 = vpop.f32.mrb[0].mxu0
  %v2251 = vadd.f32 0.0, %v2250
  %v2252 = vpop.f32.mrb[0].mxu0
  %v2253 = vadd.f32 0.0, %v2252
  %v2254 = vpop.f32.mrb[0].mxu0
  %v2255 = vadd.f32 0.0, %v2254
  %2256 = vmatprep.mubr.bf16.mxu0 %v2065
  %2257 = vmatmul.mubr.bf16.gmra.mrb[0].mxu0 %v2064
  %v2258 = vpop.f32.mrb[0].mxu0
  %v2259 = vadd.f32 0.0, %v2258
  %v2260 = vpop.f32.mrb[0].mxu0
  %v2261 = vadd.f32 0.0, %v2260
  %v2262 = vpop.f32.mrb[0].mxu0
  %v2263 = vadd.f32 0.0, %v2262
  %v2264 = vpop.f32.mrb[0].mxu0
  %v2265 = vadd.f32 0.0, %v2264
  %2266 = vmatprep.mubr.bf16.mxu0 %v2067
  %2267 = vmatmul.mubr.bf16.gmra.mrb[0].mxu0 %v2066
  %v2268 = vpop.f32.mrb[0].mxu0
  %v2269 = vadd.f32 0.0, %v2268
  %v2270 = vpop.f32.mrb[0].mxu0
  %v2271 = vadd.f32 0.0, %v2270
  %v2272 = vpop.f32.mrb[0].mxu0
  %v2273 = vadd.f32 0.0, %v2272
  %v2274 = vpop.f32.mrb[0].mxu0
  %v2275 = vadd.f32 0.0, %v2274
  %2276 = vmatprep.mubr.bf16.mxu0 %v2069
  %2277 = vmatmul.mubr.bf16.gmra.mrb[0].mxu0 %v2068
  %v2278 = vpop.f32.mrb[0].mxu0
  %v2279 = vadd.f32 0.0, %v2278
  %v2280 = vpop.f32.mrb[0].mxu0
  %v2281 = vadd.f32 0.0, %v2280
  %v2282 = vpop.f32.mrb[0].mxu0
  %v2283 = vadd.f32 0.0, %v2282
  %v2284 = vpop.f32.mrb[0].mxu0
  %v2285 = vadd.f32 0.0, %v2284
  %2286 = vmatprep.mubr.bf16.mxu0 %v2071
  %2287 = vmatmul.mubr.bf16.gmra.mrb[0].mxu0 %v2070
  %v2288 = vpop.f32.mrb[0].mxu0
  %v2289 = vadd.f32 0.0, %v2288
  %v2290 = vpop.f32.mrb[0].mxu0
  %v2291 = vadd.f32 0.0, %v2290
  %v2292 = vpop.f32.mrb[0].mxu0
  %v2293 = vadd.f32 0.0, %v2292
  %v2294 = vpop.f32.mrb[0].mxu0
  %v2295 = vadd.f32 0.0, %v2294
  %2296 = vdwg.mxu0
  %2297 = vst [vmem:[%s6] sm:$0xff] %v2139
  %2298 = vst [vmem:[%s6 + $0x8] sm:$0xff] %v2141
  %2299 = vst [vmem:[%s6 + $0x10] sm:$0xff] %v2143
  %2300 = vst [vmem:[%s6 + $0x18] sm:$0xff] %v2145
  %2301 = vst [vmem:[%s6 + $0x20] sm:$0xff] %v2149
  %2302 = vst [vmem:[%s6 + $0x28] sm:$0xff] %v2151
  %2303 = vst [vmem:[%s6 + $0x30] sm:$0xff] %v2153
  %2304 = vst [vmem:[%s6 + $0x38] sm:$0xff] %v2155
  %2305 = vst [vmem:[%s6 + $0x40] sm:$0xff] %v2159
  %2306 = vst [vmem:[%s6 + $0x48] sm:$0xff] %v2161
  %2307 = vst [vmem:[%s6 + $0x50] sm:$0xff] %v2163
  %2308 = vst [vmem:[%s6 + $0x58] sm:$0xff] %v2165
  %2309 = vst [vmem:[%s6 + $0x60] sm:$0xff] %v2169
  %2310 = vst [vmem:[%s6 + $0x68] sm:$0xff] %v2171
  %2311 = vst [vmem:[%s6 + $0x70] sm:$0xff] %v2173
  %2312 = vst [vmem:[%s6 + $0x78] sm:$0xff] %v2175
  %2313 = vst [vmem:[%s6 + $0x80] sm:$0xff] %v2179
  %2314 = vst [vmem:[%s6 + $0x88] sm:$0xff] %v2181
  %2315 = vst [vmem:[%s6 + $0x90] sm:$0xff] %v2183
  %2316 = vst [vmem:[%s6 + $0x98] sm:$0xff] %v2185
  %2317 = vst [vmem:[%s6 + $0xa0] sm:$0xff] %v2189
  %2318 = vst [vmem:[%s6 + $0xa8] sm:$0xff] %v2191
  %2319 = vst [vmem:[%s6 + $0xb0] sm:$0xff] %v2193
  %2320 = vst [vmem:[%s6 + $0xb8] sm:$0xff] %v2195
  %2321 = vst [vmem:[%s6 + $0xc0] sm:$0xff] %v2199
  %2322 = vst [vmem:[%s6 + $0xc8] sm:$0xff] %v2201
  %2323 = vst [vmem:[%s6 + $0xd0] sm:$0xff] %v2203
  %2324 = vst [vmem:[%s6 + $0xd8] sm:$0xff] %v2205
  %2325 = vst [vmem:[%s6 + $0xe0] sm:$0xff] %v2209
  %2326 = vst [vmem:[%s6 + $0xe8] sm:$0xff] %v2211
  %2327 = vst [vmem:[%s6 + $0xf0] sm:$0xff] %v2213
  %2328 = vst [vmem:[%s6 + $0xf8] sm:$0xff] %v2215
  %2329 = vst [vmem:[%s6 + $0x100] sm:$0xff] %v2219
  %2330 = vst [vmem:[%s6 + $0x108] sm:$0xff] %v2221
  %2331 = vst [vmem:[%s6 + $0x110] sm:$0xff] %v2223
  %2332 = vst [vmem:[%s6 + $0x118] sm:$0xff] %v2225
  %2333 = vst [vmem:[%s6 + $0x120] sm:$0xff] %v2229
  %2334 = vst [vmem:[%s6 + $0x128] sm:$0xff] %v2231
  %2335 = vst [vmem:[%s6 + $0x130] sm:$0xff] %v2233
  %2336 = vst [vmem:[%s6 + $0x138] sm:$0xff] %v2235
  %2337 = vst [vmem:[%s6 + $0x140] sm:$0xff] %v2239
  %2338 = vst [vmem:[%s6 + $0x148] sm:$0xff] %v2241
  %2339 = vst [vmem:[%s6 + $0x150] sm:$0xff] %v2243
  %2340 = vst [vmem:[%s6 + $0x158] sm:$0xff] %v2245
  %2341 = vst [vmem:[%s6 + $0x160] sm:$0xff] %v2249
  %2342 = vst [vmem:[%s6 + $0x168] sm:$0xff] %v2251
  %2343 = vst [vmem:[%s6 + $0x170] sm:$0xff] %v2253
  %2344 = vst [vmem:[%s6 + $0x178] sm:$0xff] %v2255
  %2345 = vst [vmem:[%s6 + $0x180] sm:$0xff] %v2259
  %2346 = vst [vmem:[%s6 + $0x188] sm:$0xff] %v2261
  %2347 = vst [vmem:[%s6 + $0x190] sm:$0xff] %v2263
  %2348 = vst [vmem:[%s6 + $0x198] sm:$0xff] %v2265
  %2349 = vst [vmem:[%s6 + $0x1a0] sm:$0xff] %v2269
  %2350 = vst [vmem:[%s6 + $0x1a8] sm:$0xff] %v2271
  %2351 = vst [vmem:[%s6 + $0x1b0] sm:$0xff] %v2273
  %2352 = vst [vmem:[%s6 + $0x1b8] sm:$0xff] %v2275
  %2353 = vst [vmem:[%s6 + $0x1c0] sm:$0xff] %v2279
  %2354 = vst [vmem:[%s6 + $0x1c8] sm:$0xff] %v2281
  %2355 = vst [vmem:[%s6 + $0x1d0] sm:$0xff] %v2283
  %2356 = vst [vmem:[%s6 + $0x1d8] sm:$0xff] %v2285
  %2357 = vst [vmem:[%s6 + $0x1e0] sm:$0xff] %v2289
  %2358 = vst [vmem:[%s6 + $0x1e8] sm:$0xff] %v2291
  %2359 = vst [vmem:[%s6 + $0x1f0] sm:$0xff] %v2293
  %2360 = vst [vmem:[%s6 + $0x1f8] sm:$0xff] %v2295
  // Predicated region
  $region26: #{fused_conv_bn_add_relu_conv.1} parent=0 // pred_check
    _
  $region27: #{fused_conv_bn_add_relu_conv.1} parent=0 // pred_check_branch
    %2362 = sbr.rel (0) target = $region29
  $region28: #{fused_conv_bn_add_relu_conv.1} parent=0 // pred_region
    _
  $region29: #{fused_conv_bn_add_relu_conv.1} parent=0 // pred_fallthru
    _
  // Predicated region
  $region30: #{fused_conv_bn_add_relu_conv.1} parent=0 // pred_check
    _
  $region31: #{fused_conv_bn_add_relu_conv.1} parent=0 // pred_check_branch
    %2364 = sbr.rel (0) target = $region33
  $region32: #{fused_conv_bn_add_relu_conv.1} parent=0 // pred_region
    _
  $region33: #{fused_conv_bn_add_relu_conv.1} parent=0 // pred_fallthru
    _

</llo_original>
